<compile_context>
chip_gen: v7x
topology: tpu7x:2x2x1
jax: 0.10.0
libtpu: 0.0.40
codegen_flags: <defaults>
</compile_context>

<pallas_src>
import math
import jax
import jax.numpy as jnp
import numpy as np
from jax.experimental import pallas as pl
from jax.experimental.pallas import tpu as pltpu

B, S, D = 2, 8, 32          # batch, seq_len, hidden_size
NUM_HEADS = 4
HEAD_DIM = D // NUM_HEADS
FFN = 4 * D                 # intermediate size
LN_EPS = 1e-12              # HF BERT layer_norm_eps
VEC_COLS = max(3 * D, FFN, D)   # width of the packed bias / LayerNorm slab


def _gelu(x):
    # TODO(synk): HF BERT default act is exact erf-GELU; using the tanh
    # approximation here (and in the reference) since lax.erf lowering in
    # Mosaic is not guaranteed on all TPU generations.
    c = math.sqrt(2.0 / math.pi)
    return 0.5 * x * (1.0 + jnp.tanh(c * (x + 0.044715 * x * x * x)))


def _layer_norm(x, g, b):
    mu = jnp.mean(x, axis=-1, keepdims=True)
    var = jnp.mean((x - mu) ** 2, axis=-1, keepdims=True)
    return (x - mu) * jax.lax.rsqrt(var + LN_EPS) * g + b


def bert_layer_kernel(x_ref, mask_ref, w_qkv_ref, w_o_ref, w1_ref, w2_ref,
                      vec_ref, out_ref):
    """One fused BERT layer over a (batch_block * S, D) row block."""
    x = x_ref[...]                               # (BB*S, D) hidden rows
    vec = vec_ref[...]                           # (8, VEC_COLS) packed vectors
    b_qkv = vec[0:1, :3 * D]
    b_o   = vec[1:2, :D]
    g1, be1 = vec[2:3, :D], vec[3:4, :D]
    b1    = vec[4:5, :FFN]
    b2    = vec[5:6, :D]
    g2, be2 = vec[6:7, :D], vec[7:8, :D]

    # --- fused Q/K/V projection: ONE MXU matmul for the whole row block ---
    qkv = jnp.dot(x, w_qkv_ref[...],
                  preferred_element_type=jnp.float32) + b_qkv      # (BB*S, 3D)

    w_o_h = w_o_ref[...]                         # (H, HEAD_DIM, D)
    scale = 1.0 / math.sqrt(HEAD_DIM)
    bb = x.shape[0] // S                         # batch elements in this block

    attn_parts = []
    for b in range(bb):                          # static unroll (1 or 2)
        qkv_b = qkv[b * S:(b + 1) * S]           # (S, 3D) sublane slice
        # Head-batched views (H, S, HEAD_DIM): leading-axis stack of static
        # lane slices (a direct lane-dim reshape/transpose risks Mosaic
        # relayout limitations at these tiny shapes).
        qh = jnp.stack([qkv_b[:, h * HEAD_DIM:(h + 1) * HEAD_DIM]
                        for h in range(NUM_HEADS)], axis=0)
        kh = jnp.stack([qkv_b[:, D + h * HEAD_DIM:D + (h + 1) * HEAD_DIM]
                        for h in range(NUM_HEADS)], axis=0)
        vh = jnp.stack([qkv_b[:, 2 * D + h * HEAD_DIM:2 * D + (h + 1) * HEAD_DIM]
                        for h in range(NUM_HEADS)], axis=0)

        mask_b = mask_ref[b]                     # (1, S) additive mask
        # head-batched attention (heads = leading batch dim of dot_general)
        scores = jnp.einsum('hqd,hkd->hqk', qh, kh,
                            preferred_element_type=jnp.float32) * scale + mask_b
        scores = scores - jnp.max(scores, axis=-1, keepdims=True)
        p = jnp.exp(scores)
        p = p * pl.reciprocal(jnp.sum(p, axis=-1, keepdims=True), approx=False)
        ctx = jnp.einsum('hqk,hkd->hqd', p, vh,
                         preferred_element_type=jnp.float32)        # (H, S, Hd)
        # Per-head output projection summed over heads (no lane concatenate).
        attn_parts.append(jnp.sum(
            jnp.einsum('hqd,hde->hqe', ctx, w_o_h,
                       preferred_element_type=jnp.float32), axis=0))  # (S, D)

    attn = attn_parts[0] if bb == 1 else jnp.concatenate(attn_parts, axis=0)

    # --- attention output + residual + LayerNorm ---
    h1 = _layer_norm(attn + b_o + x, g1, be1)

    # --- FFN (GELU) + residual + LayerNorm: two block-wide MXU matmuls ---
    inter = _gelu(jnp.dot(h1, w1_ref[...],
                          preferred_element_type=jnp.float32) + b1)
    ffn = jnp.dot(inter, w2_ref[...], preferred_element_type=jnp.float32) + b2
    out_ref[...] = _layer_norm(ffn + h1, g2, be2)


def pack_params(params):
    """HF-style per-tensor params -> 5 packed kernel inputs."""
    (wq, bq, wk, bk, wv, bv, wo, bo, g1, be1, w1, b1, w2, b2, g2, be2) = params
    w_qkv = jnp.concatenate([wq, wk, wv], axis=1)            # (D, 3D)
    w_o_h = wo.reshape(NUM_HEADS, HEAD_DIM, D)               # (H, Hd, D)
    vecs = jnp.zeros((8, VEC_COLS), jnp.float32)
    vecs = vecs.at[0, :3 * D].set(jnp.concatenate([bq, bk, bv], axis=1)[0])
    vecs = vecs.at[1, :D].set(bo[0])
    vecs = vecs.at[2, :D].set(g1[0])
    vecs = vecs.at[3, :D].set(be1[0])
    vecs = vecs.at[4, :FFN].set(b1[0])
    vecs = vecs.at[5, :D].set(b2[0])
    vecs = vecs.at[6, :D].set(g2[0])
    vecs = vecs.at[7, :D].set(be2[0])
    return w_qkv, w_o_h, w1, w2, vecs


def _tensorcores_per_chip():
    try:
        kind = jax.devices()[0].device_kind.lower()
    except Exception:
        return 1
    return 2 if ("v7" in kind or "7x" in kind) else 1


def bert_encoder_block(hidden_states, attention_mask, params):
    """Mirrors BertEncoderBlock.forward: (hidden, mask) -> (hidden', mask)."""
    w_qkv, w_o_h, w1, w2, vecs = pack_params(params)
    b, s, d = hidden_states.shape
    x2 = hidden_states.reshape(b * s, d).astype(jnp.float32)
    mask3 = attention_mask.reshape(b, 1, s).astype(jnp.float32)

    # Single-TC chips (v5e/v6e): one program over all B*S rows -> no per-step
    # pipeline overhead.  v7x (2 TCs): keep batch as a parallel grid axis.
    bblk = 1 if _tensorcores_per_chip() >= 2 else b
    grid = (b // bblk,)

    def whole(shape):
        # whole parameter resident in VMEM, same block every grid step
        return pl.BlockSpec(shape, lambda i: (0,) * len(shape))

    out = pl.pallas_call(
        bert_layer_kernel,
        out_shape=jax.ShapeDtypeStruct((b * s, d), jnp.float32),
        grid=grid,
        in_specs=[
            pl.BlockSpec((bblk * s, d), lambda i: (i, 0)),      # hidden rows
            pl.BlockSpec((bblk, 1, s), lambda i: (i, 0, 0)),    # additive mask
            whole(w_qkv.shape), whole(w_o_h.shape),
            whole(w1.shape), whole(w2.shape), whole(vecs.shape),
        ],
        out_specs=pl.BlockSpec((bblk * s, d), lambda i: (i, 0)),
        compiler_params=pltpu.CompilerParams(
            dimension_semantics=("parallel",)),
        # TODO(synk): at real BERT sizes (D=768, FFN=3072) tile the FFN matmuls
        # over a grid axis, set vmem_limit_bytes, and cast matmul operands to
        # bf16 on v6e/v7x; D=768 is already lane-dense (multiple of 128).
    )(x2, mask3, w_qkv, w_o_h, w1, w2, vecs)
    return out.reshape(b, s, d), attention_mask


def reference(x, mask4, params):
    (wq, bq, wk, bk, wv, bv, wo, bo, g1, be1, w1, b1, w2, b2, g2, be2) = params
    q = (x @ wq + bq).reshape(B, S, NUM_HEADS, HEAD_DIM).transpose(0, 2, 1, 3)
    k = (x @ wk + bk).reshape(B, S, NUM_HEADS, HEAD_DIM).transpose(0, 2, 1, 3)
    v = (x @ wv + bv).reshape(B, S, NUM_HEADS, HEAD_DIM).transpose(0, 2, 1, 3)
    scores = jnp.einsum("bhqd,bhkd->bhqk", q, k) / math.sqrt(HEAD_DIM) + mask4
    p = jax.nn.softmax(scores, axis=-1)
    ctx = jnp.einsum("bhqk,bhkd->bhqd", p, v).transpose(0, 2, 1, 3).reshape(B, S, D)
    attn = ctx @ wo + bo
    h1 = _layer_norm(attn + x, g1, be1)
    inter = _gelu(h1 @ w1 + b1)
    ffn = inter @ w2 + b2
    return _layer_norm(ffn + h1, g2, be2)


if __name__ == "__main__":
    key = jax.random.PRNGKey(0)
    k_x, *k_w = jax.random.split(key, 14)

    def w(k, shape):
        return (0.02 * jax.random.normal(k, shape)).astype(jnp.float32)

    params = (
        w(k_w[0], (D, D)), w(k_w[1], (1, D)),            # query
        w(k_w[2], (D, D)), w(k_w[3], (1, D)),            # key
        w(k_w[4], (D, D)), w(k_w[5], (1, D)),            # value
        w(k_w[6], (D, D)), w(k_w[7], (1, D)),            # attention output dense
        jnp.ones((1, D), jnp.float32), jnp.zeros((1, D), jnp.float32),   # LN1
        w(k_w[8], (D, FFN)), w(k_w[9], (1, FFN)),        # intermediate dense
        w(k_w[10], (FFN, D)), w(k_w[11], (1, D)),        # output dense
        jnp.ones((1, D), jnp.float32), jnp.zeros((1, D), jnp.float32),   # LN2
    )

    hidden_states = jax.random.normal(k_x, (B, S, D), dtype=jnp.float32)

    # HF-style extended additive attention mask: batch 0 fully valid, batch 1
    # has the last 3 positions padded out.
    lengths = jnp.array([S, S - 3])
    valid = (jnp.arange(S)[None, :] < lengths[:, None]).astype(jnp.float32)  # (B,S)
    attention_mask = ((1.0 - valid) * -10000.0)[:, None, None, :]            # (B,1,1,S)

    out_hidden, out_mask = bert_encoder_block(hidden_states, attention_mask, params)
    out_hidden = jax.block_until_ready(out_hidden)

    ref = reference(hidden_states, attention_mask, params)
    np.testing.assert_allclose(np.asarray(out_hidden), np.asarray(ref),
                               rtol=1e-5, atol=1e-5)
    assert out_mask.shape == attention_mask.shape

    print("KERNEL_OK")
</pallas_src>

<mosaic_0001>
module attributes {stable_mosaic.version = 11 : i64} {
  func.func @bert_layer_kernel(%arg0: i32, %arg1: memref<16x32xf32, #tpu.memory_space<vmem>>, %arg2: memref<2x1x8xf32, #tpu.memory_space<vmem>>, %arg3: memref<32x96xf32, #tpu.memory_space<vmem>>, %arg4: memref<4x8x32xf32, #tpu.memory_space<vmem>>, %arg5: memref<32x128xf32, #tpu.memory_space<vmem>>, %arg6: memref<128x32xf32, #tpu.memory_space<vmem>>, %arg7: memref<8x128xf32, #tpu.memory_space<vmem>>, %arg8: memref<16x32xf32, #tpu.memory_space<vmem>>) attributes {dimension_semantics = [#tpu.dimension_semantics<parallel>], iteration_bounds = array<i64: 1>, scalar_prefetch = 0 : i64, scratch_operands = 0 : i64, tpu.core_type = #tpu.core_type<tc>, window_params = [{transform_indices = @transform_0, window_bounds = array<i64: 16, 32>}, {transform_indices = @transform_1, window_bounds = array<i64: 2, 1, 8>}, {pipeline_mode = #tpu.pipeline_mode<synchronous>, transform_indices = @transform_2, window_bounds = array<i64: 32, 96>}, {pipeline_mode = #tpu.pipeline_mode<synchronous>, transform_indices = @transform_3, window_bounds = array<i64: 4, 8, 32>}, {pipeline_mode = #tpu.pipeline_mode<synchronous>, transform_indices = @transform_4, window_bounds = array<i64: 32, 128>}, {pipeline_mode = #tpu.pipeline_mode<synchronous>, transform_indices = @transform_5, window_bounds = array<i64: 128, 32>}, {pipeline_mode = #tpu.pipeline_mode<synchronous>, transform_indices = @transform_6, window_bounds = array<i64: 8, 128>}, {transform_indices = @transform_7, window_bounds = array<i64: 16, 32>}]} {
    %c0 = arith.constant 0 : index
    %c0_0 = arith.constant 0 : index
    %0 = vector.load %arg1[%c0, %c0_0] : memref<16x32xf32, #tpu.memory_space<vmem>>, vector<16x32xf32>
    %c0_1 = arith.constant 0 : index
    %c0_2 = arith.constant 0 : index
    %1 = vector.load %arg7[%c0_1, %c0_2] : memref<8x128xf32, #tpu.memory_space<vmem>>, vector<8x128xf32>
    %2 = vector.extract_strided_slice %1 {offsets = [0, 0], sizes = [1, 96], strides = [1, 1]} : vector<8x128xf32> to vector<1x96xf32>
    %3 = vector.extract_strided_slice %1 {offsets = [1, 0], sizes = [1, 32], strides = [1, 1]} : vector<8x128xf32> to vector<1x32xf32>
    %4 = vector.extract_strided_slice %1 {offsets = [2, 0], sizes = [1, 32], strides = [1, 1]} : vector<8x128xf32> to vector<1x32xf32>
    %5 = vector.extract_strided_slice %1 {offsets = [3, 0], sizes = [1, 32], strides = [1, 1]} : vector<8x128xf32> to vector<1x32xf32>
    %6 = vector.extract_strided_slice %1 {offsets = [4, 0], sizes = [1, 128], strides = [1, 1]} : vector<8x128xf32> to vector<1x128xf32>
    %7 = vector.extract_strided_slice %1 {offsets = [5, 0], sizes = [1, 32], strides = [1, 1]} : vector<8x128xf32> to vector<1x32xf32>
    %8 = vector.extract_strided_slice %1 {offsets = [6, 0], sizes = [1, 32], strides = [1, 1]} : vector<8x128xf32> to vector<1x32xf32>
    %9 = vector.extract_strided_slice %1 {offsets = [7, 0], sizes = [1, 32], strides = [1, 1]} : vector<8x128xf32> to vector<1x32xf32>
    %c0_3 = arith.constant 0 : index
    %c0_4 = arith.constant 0 : index
    %10 = vector.load %arg3[%c0_3, %c0_4] : memref<32x96xf32, #tpu.memory_space<vmem>>, vector<32x96xf32>
    %cst = arith.constant dense<0.000000e+00> : vector<16x96xf32>
    %11 = tpu.matmul %0, %10, %cst {dimension_numbers = #tpu.dot_dimension_numbers<[1], [0], [0], [1], [0, 0, 1, 1], [], []>} : vector<16x32xf32>, vector<32x96xf32>, vector<16x96xf32> -> vector<16x96xf32>
    %12 = vector.broadcast %2 : vector<1x96xf32> to vector<16x96xf32>
    %13 = arith.addf %11, %12 : vector<16x96xf32>
    %c0_5 = arith.constant 0 : index
    %c0_6 = arith.constant 0 : index
    %c0_7 = arith.constant 0 : index
    %14 = vector.load %arg4[%c0_5, %c0_6, %c0_7] : memref<4x8x32xf32, #tpu.memory_space<vmem>>, vector<4x8x32xf32>
    %15 = vector.extract_strided_slice %13 {offsets = [0, 0], sizes = [8, 96], strides = [1, 1]} : vector<16x96xf32> to vector<8x96xf32>
    %16 = vector.extract_strided_slice %15 {offsets = [0, 0], sizes = [8, 8], strides = [1, 1]} : vector<8x96xf32> to vector<8x8xf32>
    %17 = vector.extract_strided_slice %15 {offsets = [0, 8], sizes = [8, 8], strides = [1, 1]} : vector<8x96xf32> to vector<8x8xf32>
    %18 = vector.extract_strided_slice %15 {offsets = [0, 16], sizes = [8, 8], strides = [1, 1]} : vector<8x96xf32> to vector<8x8xf32>
    %19 = vector.extract_strided_slice %15 {offsets = [0, 24], sizes = [8, 8], strides = [1, 1]} : vector<8x96xf32> to vector<8x8xf32>
    %20 = vector.shape_cast %16 : vector<8x8xf32> to vector<1x8x8xf32>
    %21 = vector.shape_cast %17 : vector<8x8xf32> to vector<1x8x8xf32>
    %22 = vector.shape_cast %18 : vector<8x8xf32> to vector<1x8x8xf32>
    %23 = vector.shape_cast %19 : vector<8x8xf32> to vector<1x8x8xf32>
    %24 = tpu.concatenate %20, %21, %22, %23 in 0 : vector<1x8x8xf32>, vector<1x8x8xf32>, vector<1x8x8xf32>, vector<1x8x8xf32> -> vector<4x8x8xf32>
    %25 = vector.extract_strided_slice %15 {offsets = [0, 32], sizes = [8, 8], strides = [1, 1]} : vector<8x96xf32> to vector<8x8xf32>
    %26 = vector.extract_strided_slice %15 {offsets = [0, 40], sizes = [8, 8], strides = [1, 1]} : vector<8x96xf32> to vector<8x8xf32>
    %27 = vector.extract_strided_slice %15 {offsets = [0, 48], sizes = [8, 8], strides = [1, 1]} : vector<8x96xf32> to vector<8x8xf32>
    %28 = vector.extract_strided_slice %15 {offsets = [0, 56], sizes = [8, 8], strides = [1, 1]} : vector<8x96xf32> to vector<8x8xf32>
    %29 = vector.shape_cast %25 : vector<8x8xf32> to vector<1x8x8xf32>
    %30 = vector.shape_cast %26 : vector<8x8xf32> to vector<1x8x8xf32>
    %31 = vector.shape_cast %27 : vector<8x8xf32> to vector<1x8x8xf32>
    %32 = vector.shape_cast %28 : vector<8x8xf32> to vector<1x8x8xf32>
    %33 = tpu.concatenate %29, %30, %31, %32 in 0 : vector<1x8x8xf32>, vector<1x8x8xf32>, vector<1x8x8xf32>, vector<1x8x8xf32> -> vector<4x8x8xf32>
    %34 = vector.extract_strided_slice %15 {offsets = [0, 64], sizes = [8, 8], strides = [1, 1]} : vector<8x96xf32> to vector<8x8xf32>
    %35 = vector.extract_strided_slice %15 {offsets = [0, 72], sizes = [8, 8], strides = [1, 1]} : vector<8x96xf32> to vector<8x8xf32>
    %36 = vector.extract_strided_slice %15 {offsets = [0, 80], sizes = [8, 8], strides = [1, 1]} : vector<8x96xf32> to vector<8x8xf32>
    %37 = vector.extract_strided_slice %15 {offsets = [0, 88], sizes = [8, 8], strides = [1, 1]} : vector<8x96xf32> to vector<8x8xf32>
    %38 = vector.shape_cast %34 : vector<8x8xf32> to vector<1x8x8xf32>
    %39 = vector.shape_cast %35 : vector<8x8xf32> to vector<1x8x8xf32>
    %40 = vector.shape_cast %36 : vector<8x8xf32> to vector<1x8x8xf32>
    %41 = vector.shape_cast %37 : vector<8x8xf32> to vector<1x8x8xf32>
    %42 = tpu.concatenate %38, %39, %40, %41 in 0 : vector<1x8x8xf32>, vector<1x8x8xf32>, vector<1x8x8xf32>, vector<1x8x8xf32> -> vector<4x8x8xf32>
    %c0_8 = arith.constant 0 : index
    %c0_9 = arith.constant 0 : index
    %c0_10 = arith.constant 0 : index
    %43 = vector.load %arg2[%c0_8, %c0_9, %c0_10] : memref<2x1x8xf32, #tpu.memory_space<vmem>>, vector<1x1x8xf32>
    %44 = vector.shape_cast %43 : vector<1x1x8xf32> to vector<1x8xf32>
    "tpu.trace_start"() <{level = 10 : i32, message = "hqd,hkd->hqk"}> : () -> ()
    %cst_11 = arith.constant dense<0.000000e+00> : vector<4x8x8xf32>
    %45 = tpu.matmul %24, %33, %cst_11 {dimension_numbers = #tpu.dot_dimension_numbers<[2], [2], [1], [1], [0, 0, 0, 1, 1, 1], [0], [0]>} : vector<4x8x8xf32>, vector<4x8x8xf32>, vector<4x8x8xf32> -> vector<4x8x8xf32>
    "tpu.trace_stop"() : () -> ()
    %cst_12 = arith.constant 0.353553385 : f32
    %46 = vector.broadcast %cst_12 : f32 to vector<4x8x8xf32>
    %47 = arith.mulf %45, %46 : vector<4x8x8xf32>
    %48 = vector.shape_cast %44 : vector<1x8xf32> to vector<1x1x8xf32>
    %49 = vector.broadcast %48 : vector<1x1x8xf32> to vector<4x8x8xf32>
    %50 = arith.addf %47, %49 : vector<4x8x8xf32>
    %cst_13 = arith.constant dense<0xFF800000> : vector<4x8xf32>
    %51 = vector.multi_reduction <maximumf>, %50, %cst_13 [2] : vector<4x8x8xf32> to vector<4x8xf32>
    %52 = vector.shape_cast %51 : vector<4x8xf32> to vector<4x8x1xf32>
    %53 = vector.broadcast %52 : vector<4x8x1xf32> to vector<4x8x8xf32>
    %54 = arith.subf %50, %53 : vector<4x8x8xf32>
    %55 = math.exp %54 : vector<4x8x8xf32>
    %cst_14 = arith.constant dense<0.000000e+00> : vector<4x8xf32>
    %56 = vector.multi_reduction <add>, %55, %cst_14 [2] : vector<4x8x8xf32> to vector<4x8xf32>
    %57 = vector.shape_cast %56 : vector<4x8xf32> to vector<4x8x1xf32>
    %58 = tpu.reciprocal %57 : vector<4x8x1xf32> -> vector<4x8x1xf32>
    %59 = vector.broadcast %58 : vector<4x8x1xf32> to vector<4x8x8xf32>
    %60 = arith.mulf %55, %59 : vector<4x8x8xf32>
    "tpu.trace_start"() <{level = 10 : i32, message = "hqk,hkd->hqd"}> : () -> ()
    %cst_15 = arith.constant dense<0.000000e+00> : vector<4x8x8xf32>
    %61 = tpu.matmul %60, %42, %cst_15 {dimension_numbers = #tpu.dot_dimension_numbers<[2], [1], [1], [2], [0, 0, 0, 1, 1, 2], [0], [0]>} : vector<4x8x8xf32>, vector<4x8x8xf32>, vector<4x8x8xf32> -> vector<4x8x8xf32>
    "tpu.trace_stop"() : () -> ()
    "tpu.trace_start"() <{level = 10 : i32, message = "hqd,hde->hqe"}> : () -> ()
    %cst_16 = arith.constant dense<0.000000e+00> : vector<4x8x32xf32>
    %62 = tpu.matmul %61, %14, %cst_16 {dimension_numbers = #tpu.dot_dimension_numbers<[2], [1], [1], [2], [0, 0, 0, 1, 1, 2], [0], [0]>} : vector<4x8x8xf32>, vector<4x8x32xf32>, vector<4x8x32xf32> -> vector<4x8x32xf32>
    "tpu.trace_stop"() : () -> ()
    %cst_17 = arith.constant dense<0.000000e+00> : vector<8x32xf32>
    %63 = vector.multi_reduction <add>, %62, %cst_17 [0] : vector<4x8x32xf32> to vector<8x32xf32>
    %64 = vector.extract_strided_slice %13 {offsets = [8, 0], sizes = [8, 96], strides = [1, 1]} : vector<16x96xf32> to vector<8x96xf32>
    %65 = vector.extract_strided_slice %64 {offsets = [0, 0], sizes = [8, 8], strides = [1, 1]} : vector<8x96xf32> to vector<8x8xf32>
    %66 = vector.extract_strided_slice %64 {offsets = [0, 8], sizes = [8, 8], strides = [1, 1]} : vector<8x96xf32> to vector<8x8xf32>
    %67 = vector.extract_strided_slice %64 {offsets = [0, 16], sizes = [8, 8], strides = [1, 1]} : vector<8x96xf32> to vector<8x8xf32>
    %68 = vector.extract_strided_slice %64 {offsets = [0, 24], sizes = [8, 8], strides = [1, 1]} : vector<8x96xf32> to vector<8x8xf32>
    %69 = vector.shape_cast %65 : vector<8x8xf32> to vector<1x8x8xf32>
    %70 = vector.shape_cast %66 : vector<8x8xf32> to vector<1x8x8xf32>
    %71 = vector.shape_cast %67 : vector<8x8xf32> to vector<1x8x8xf32>
    %72 = vector.shape_cast %68 : vector<8x8xf32> to vector<1x8x8xf32>
    %73 = tpu.concatenate %69, %70, %71, %72 in 0 : vector<1x8x8xf32>, vector<1x8x8xf32>, vector<1x8x8xf32>, vector<1x8x8xf32> -> vector<4x8x8xf32>
    %74 = vector.extract_strided_slice %64 {offsets = [0, 32], sizes = [8, 8], strides = [1, 1]} : vector<8x96xf32> to vector<8x8xf32>
    %75 = vector.extract_strided_slice %64 {offsets = [0, 40], sizes = [8, 8], strides = [1, 1]} : vector<8x96xf32> to vector<8x8xf32>
    %76 = vector.extract_strided_slice %64 {offsets = [0, 48], sizes = [8, 8], strides = [1, 1]} : vector<8x96xf32> to vector<8x8xf32>
    %77 = vector.extract_strided_slice %64 {offsets = [0, 56], sizes = [8, 8], strides = [1, 1]} : vector<8x96xf32> to vector<8x8xf32>
    %78 = vector.shape_cast %74 : vector<8x8xf32> to vector<1x8x8xf32>
    %79 = vector.shape_cast %75 : vector<8x8xf32> to vector<1x8x8xf32>
    %80 = vector.shape_cast %76 : vector<8x8xf32> to vector<1x8x8xf32>
    %81 = vector.shape_cast %77 : vector<8x8xf32> to vector<1x8x8xf32>
    %82 = tpu.concatenate %78, %79, %80, %81 in 0 : vector<1x8x8xf32>, vector<1x8x8xf32>, vector<1x8x8xf32>, vector<1x8x8xf32> -> vector<4x8x8xf32>
    %83 = vector.extract_strided_slice %64 {offsets = [0, 64], sizes = [8, 8], strides = [1, 1]} : vector<8x96xf32> to vector<8x8xf32>
    %84 = vector.extract_strided_slice %64 {offsets = [0, 72], sizes = [8, 8], strides = [1, 1]} : vector<8x96xf32> to vector<8x8xf32>
    %85 = vector.extract_strided_slice %64 {offsets = [0, 80], sizes = [8, 8], strides = [1, 1]} : vector<8x96xf32> to vector<8x8xf32>
    %86 = vector.extract_strided_slice %64 {offsets = [0, 88], sizes = [8, 8], strides = [1, 1]} : vector<8x96xf32> to vector<8x8xf32>
    %87 = vector.shape_cast %83 : vector<8x8xf32> to vector<1x8x8xf32>
    %88 = vector.shape_cast %84 : vector<8x8xf32> to vector<1x8x8xf32>
    %89 = vector.shape_cast %85 : vector<8x8xf32> to vector<1x8x8xf32>
    %90 = vector.shape_cast %86 : vector<8x8xf32> to vector<1x8x8xf32>
    %91 = tpu.concatenate %87, %88, %89, %90 in 0 : vector<1x8x8xf32>, vector<1x8x8xf32>, vector<1x8x8xf32>, vector<1x8x8xf32> -> vector<4x8x8xf32>
    %c1 = arith.constant 1 : index
    %c0_18 = arith.constant 0 : index
    %c0_19 = arith.constant 0 : index
    %92 = vector.load %arg2[%c1, %c0_18, %c0_19] : memref<2x1x8xf32, #tpu.memory_space<vmem>>, vector<1x1x8xf32>
    %93 = vector.shape_cast %92 : vector<1x1x8xf32> to vector<1x8xf32>
    "tpu.trace_start"() <{level = 10 : i32, message = "hqd,hkd->hqk"}> : () -> ()
    %cst_20 = arith.constant dense<0.000000e+00> : vector<4x8x8xf32>
    %94 = tpu.matmul %73, %82, %cst_20 {dimension_numbers = #tpu.dot_dimension_numbers<[2], [2], [1], [1], [0, 0, 0, 1, 1, 1], [0], [0]>} : vector<4x8x8xf32>, vector<4x8x8xf32>, vector<4x8x8xf32> -> vector<4x8x8xf32>
    "tpu.trace_stop"() : () -> ()
    %cst_21 = arith.constant 0.353553385 : f32
    %95 = vector.broadcast %cst_21 : f32 to vector<4x8x8xf32>
    %96 = arith.mulf %94, %95 : vector<4x8x8xf32>
    %97 = vector.shape_cast %93 : vector<1x8xf32> to vector<1x1x8xf32>
    %98 = vector.broadcast %97 : vector<1x1x8xf32> to vector<4x8x8xf32>
    %99 = arith.addf %96, %98 : vector<4x8x8xf32>
    %cst_22 = arith.constant dense<0xFF800000> : vector<4x8xf32>
    %100 = vector.multi_reduction <maximumf>, %99, %cst_22 [2] : vector<4x8x8xf32> to vector<4x8xf32>
    %101 = vector.shape_cast %100 : vector<4x8xf32> to vector<4x8x1xf32>
    %102 = vector.broadcast %101 : vector<4x8x1xf32> to vector<4x8x8xf32>
    %103 = arith.subf %99, %102 : vector<4x8x8xf32>
    %104 = math.exp %103 : vector<4x8x8xf32>
    %cst_23 = arith.constant dense<0.000000e+00> : vector<4x8xf32>
    %105 = vector.multi_reduction <add>, %104, %cst_23 [2] : vector<4x8x8xf32> to vector<4x8xf32>
    %106 = vector.shape_cast %105 : vector<4x8xf32> to vector<4x8x1xf32>
    %107 = tpu.reciprocal %106 : vector<4x8x1xf32> -> vector<4x8x1xf32>
    %108 = vector.broadcast %107 : vector<4x8x1xf32> to vector<4x8x8xf32>
    %109 = arith.mulf %104, %108 : vector<4x8x8xf32>
    "tpu.trace_start"() <{level = 10 : i32, message = "hqk,hkd->hqd"}> : () -> ()
    %cst_24 = arith.constant dense<0.000000e+00> : vector<4x8x8xf32>
    %110 = tpu.matmul %109, %91, %cst_24 {dimension_numbers = #tpu.dot_dimension_numbers<[2], [1], [1], [2], [0, 0, 0, 1, 1, 2], [0], [0]>} : vector<4x8x8xf32>, vector<4x8x8xf32>, vector<4x8x8xf32> -> vector<4x8x8xf32>
    "tpu.trace_stop"() : () -> ()
    "tpu.trace_start"() <{level = 10 : i32, message = "hqd,hde->hqe"}> : () -> ()
    %cst_25 = arith.constant dense<0.000000e+00> : vector<4x8x32xf32>
    %111 = tpu.matmul %110, %14, %cst_25 {dimension_numbers = #tpu.dot_dimension_numbers<[2], [1], [1], [2], [0, 0, 0, 1, 1, 2], [0], [0]>} : vector<4x8x8xf32>, vector<4x8x32xf32>, vector<4x8x32xf32> -> vector<4x8x32xf32>
    "tpu.trace_stop"() : () -> ()
    %cst_26 = arith.constant dense<0.000000e+00> : vector<8x32xf32>
    %112 = vector.multi_reduction <add>, %111, %cst_26 [0] : vector<4x8x32xf32> to vector<8x32xf32>
    %113 = tpu.concatenate %63, %112 in 0 : vector<8x32xf32>, vector<8x32xf32> -> vector<16x32xf32>
    %114 = vector.broadcast %3 : vector<1x32xf32> to vector<16x32xf32>
    %115 = arith.addf %113, %114 : vector<16x32xf32>
    %116 = arith.addf %115, %0 : vector<16x32xf32>
    %cst_27 = arith.constant dense<0.000000e+00> : vector<16xf32>
    %117 = vector.multi_reduction <add>, %116, %cst_27 [1] : vector<16x32xf32> to vector<16xf32>
    %118 = vector.shape_cast %117 : vector<16xf32> to vector<16x1xf32>
    %cst_28 = arith.constant 3.200000e+01 : f32
    %119 = vector.broadcast %cst_28 : f32 to vector<16x1xf32>
    %120 = arith.divf %118, %119 : vector<16x1xf32>
    %121 = vector.broadcast %120 : vector<16x1xf32> to vector<16x32xf32>
    %122 = arith.subf %116, %121 : vector<16x32xf32>
    %123 = arith.mulf %122, %122 : vector<16x32xf32>
    %cst_29 = arith.constant dense<0.000000e+00> : vector<16xf32>
    %124 = vector.multi_reduction <add>, %123, %cst_29 [1] : vector<16x32xf32> to vector<16xf32>
    %125 = vector.shape_cast %124 : vector<16xf32> to vector<16x1xf32>
    %cst_30 = arith.constant 3.200000e+01 : f32
    %126 = vector.broadcast %cst_30 : f32 to vector<16x1xf32>
    %127 = arith.divf %125, %126 : vector<16x1xf32>
    %128 = vector.broadcast %120 : vector<16x1xf32> to vector<16x32xf32>
    %129 = arith.subf %116, %128 : vector<16x32xf32>
    %cst_31 = arith.constant 9.99999996E-13 : f32
    %130 = vector.broadcast %cst_31 : f32 to vector<16x1xf32>
    %131 = arith.addf %127, %130 : vector<16x1xf32>
    %132 = math.rsqrt %131 : vector<16x1xf32>
    %133 = vector.broadcast %132 : vector<16x1xf32> to vector<16x32xf32>
    %134 = arith.mulf %129, %133 : vector<16x32xf32>
    %135 = vector.broadcast %4 : vector<1x32xf32> to vector<16x32xf32>
    %136 = arith.mulf %134, %135 : vector<16x32xf32>
    %137 = vector.broadcast %5 : vector<1x32xf32> to vector<16x32xf32>
    %138 = arith.addf %136, %137 : vector<16x32xf32>
    %c0_32 = arith.constant 0 : index
    %c0_33 = arith.constant 0 : index
    %139 = vector.load %arg5[%c0_32, %c0_33] : memref<32x128xf32, #tpu.memory_space<vmem>>, vector<32x128xf32>
    %cst_34 = arith.constant dense<0.000000e+00> : vector<16x128xf32>
    %140 = tpu.matmul %138, %139, %cst_34 {dimension_numbers = #tpu.dot_dimension_numbers<[1], [0], [0], [1], [0, 0, 1, 1], [], []>} : vector<16x32xf32>, vector<32x128xf32>, vector<16x128xf32> -> vector<16x128xf32>
    %141 = vector.broadcast %6 : vector<1x128xf32> to vector<16x128xf32>
    %142 = arith.addf %140, %141 : vector<16x128xf32>
    %cst_35 = arith.constant 5.000000e-01 : f32
    %143 = vector.broadcast %cst_35 : f32 to vector<16x128xf32>
    %144 = arith.mulf %143, %142 : vector<16x128xf32>
    %cst_36 = arith.constant 4.471500e-02 : f32
    %145 = vector.broadcast %cst_36 : f32 to vector<16x128xf32>
    %146 = arith.mulf %145, %142 : vector<16x128xf32>
    %147 = arith.mulf %146, %142 : vector<16x128xf32>
    %148 = arith.mulf %147, %142 : vector<16x128xf32>
    %149 = arith.addf %142, %148 : vector<16x128xf32>
    %cst_37 = arith.constant 0.797884583 : f32
    %150 = vector.broadcast %cst_37 : f32 to vector<16x128xf32>
    %151 = arith.mulf %150, %149 : vector<16x128xf32>
    %152 = math.tanh %151 : vector<16x128xf32>
    %cst_38 = arith.constant 1.000000e+00 : f32
    %153 = vector.broadcast %cst_38 : f32 to vector<16x128xf32>
    %154 = arith.addf %153, %152 : vector<16x128xf32>
    %155 = arith.mulf %144, %154 : vector<16x128xf32>
    %c0_39 = arith.constant 0 : index
    %c0_40 = arith.constant 0 : index
    %156 = vector.load %arg6[%c0_39, %c0_40] : memref<128x32xf32, #tpu.memory_space<vmem>>, vector<128x32xf32>
    %cst_41 = arith.constant dense<0.000000e+00> : vector<16x32xf32>
    %157 = tpu.matmul %155, %156, %cst_41 {dimension_numbers = #tpu.dot_dimension_numbers<[1], [0], [0], [1], [0, 0, 1, 1], [], []>} : vector<16x128xf32>, vector<128x32xf32>, vector<16x32xf32> -> vector<16x32xf32>
    %158 = vector.broadcast %7 : vector<1x32xf32> to vector<16x32xf32>
    %159 = arith.addf %157, %158 : vector<16x32xf32>
    %160 = arith.addf %159, %138 : vector<16x32xf32>
    %cst_42 = arith.constant dense<0.000000e+00> : vector<16xf32>
    %161 = vector.multi_reduction <add>, %160, %cst_42 [1] : vector<16x32xf32> to vector<16xf32>
    %162 = vector.shape_cast %161 : vector<16xf32> to vector<16x1xf32>
    %cst_43 = arith.constant 3.200000e+01 : f32
    %163 = vector.broadcast %cst_43 : f32 to vector<16x1xf32>
    %164 = arith.divf %162, %163 : vector<16x1xf32>
    %165 = vector.broadcast %164 : vector<16x1xf32> to vector<16x32xf32>
    %166 = arith.subf %160, %165 : vector<16x32xf32>
    %167 = arith.mulf %166, %166 : vector<16x32xf32>
    %cst_44 = arith.constant dense<0.000000e+00> : vector<16xf32>
    %168 = vector.multi_reduction <add>, %167, %cst_44 [1] : vector<16x32xf32> to vector<16xf32>
    %169 = vector.shape_cast %168 : vector<16xf32> to vector<16x1xf32>
    %cst_45 = arith.constant 3.200000e+01 : f32
    %170 = vector.broadcast %cst_45 : f32 to vector<16x1xf32>
    %171 = arith.divf %169, %170 : vector<16x1xf32>
    %172 = vector.broadcast %164 : vector<16x1xf32> to vector<16x32xf32>
    %173 = arith.subf %160, %172 : vector<16x32xf32>
    %cst_46 = arith.constant 9.99999996E-13 : f32
    %174 = vector.broadcast %cst_46 : f32 to vector<16x1xf32>
    %175 = arith.addf %171, %174 : vector<16x1xf32>
    %176 = math.rsqrt %175 : vector<16x1xf32>
    %177 = vector.broadcast %176 : vector<16x1xf32> to vector<16x32xf32>
    %178 = arith.mulf %173, %177 : vector<16x32xf32>
    %179 = vector.broadcast %8 : vector<1x32xf32> to vector<16x32xf32>
    %180 = arith.mulf %178, %179 : vector<16x32xf32>
    %181 = vector.broadcast %9 : vector<1x32xf32> to vector<16x32xf32>
    %182 = arith.addf %180, %181 : vector<16x32xf32>
    %c0_47 = arith.constant 0 : index
    %c0_48 = arith.constant 0 : index
    %183 = vector.load %arg8[%c0_47, %c0_48] : memref<16x32xf32, #tpu.memory_space<vmem>>, vector<16x32xf32>
    tpu.vector_store %arg8[%c0_47, %c0_48], %182 {strides = array<i32>} : memref<16x32xf32, #tpu.memory_space<vmem>>, vector<16x32xf32>,
    return
  }
  func.func @transform_0(%arg0: i32) -> (i32, i32) {
    %c0_i32 = arith.constant 0 : i32
    %c0_i32_0 = arith.constant 0 : i32
    return %arg0, %c0_i32 : i32, i32
  }
  func.func @transform_1(%arg0: i32) -> (i32, i32, i32) {
    %c0_i32 = arith.constant 0 : i32
    %c0_i32_0 = arith.constant 0 : i32
    %c0_i32_1 = arith.constant 0 : i32
    return %arg0, %c0_i32, %c0_i32_0 : i32, i32, i32
  }
  func.func @transform_2(%arg0: i32) -> (i32, i32) {
    %c0_i32 = arith.constant 0 : i32
    %c0_i32_0 = arith.constant 0 : i32
    %c0_i32_1 = arith.constant 0 : i32
    return %c0_i32, %c0_i32_0 : i32, i32
  }
  func.func @transform_3(%arg0: i32) -> (i32, i32, i32) {
    %c0_i32 = arith.constant 0 : i32
    %c0_i32_0 = arith.constant 0 : i32
    %c0_i32_1 = arith.constant 0 : i32
    %c0_i32_2 = arith.constant 0 : i32
    return %c0_i32, %c0_i32_0, %c0_i32_1 : i32, i32, i32
  }
  func.func @transform_4(%arg0: i32) -> (i32, i32) {
    %c0_i32 = arith.constant 0 : i32
    %c0_i32_0 = arith.constant 0 : i32
    %c0_i32_1 = arith.constant 0 : i32
    return %c0_i32, %c0_i32_0 : i32, i32
  }
  func.func @transform_5(%arg0: i32) -> (i32, i32) {
    %c0_i32 = arith.constant 0 : i32
    %c0_i32_0 = arith.constant 0 : i32
    %c0_i32_1 = arith.constant 0 : i32
    return %c0_i32, %c0_i32_0 : i32, i32
  }
  func.func @transform_6(%arg0: i32) -> (i32, i32) {
    %c0_i32 = arith.constant 0 : i32
    %c0_i32_0 = arith.constant 0 : i32
    %c0_i32_1 = arith.constant 0 : i32
    return %c0_i32, %c0_i32_0 : i32, i32
  }
  func.func @transform_7(%arg0: i32) -> (i32, i32) {
    %c0_i32 = arith.constant 0 : i32
    %c0_i32_0 = arith.constant 0 : i32
    return %arg0, %c0_i32 : i32, i32
  }
}

</mosaic_0001>

<llo_original>
// kernel: tpu_custom_call.1
$region0: #{tpu_custom_call.1}
  #allocation0 [shape = 'u32[]', space=smem, size = 0x4, offset = 0x4, fixed_abs, tag = 'smem constant byte address 0x4 - core index']
  #allocation1 [shape = 'u32[144,128]{1,0:T(1,128)}', space=vmem, size = 0x12000, scoped, tag = 'internal scratch']
  %s0 = inlined_call_operand.vmem [shape: f32[16,32], index: 0, kind: input, shape index: {}]
  %s1 = inlined_call_operand.vmem [shape: f32[2,1,8], index: 1, kind: input, shape index: {}]
  %s2 = inlined_call_operand.vmem [shape: f32[32,96], index: 2, kind: input, shape index: {}]
  %s3 = inlined_call_operand.vmem [shape: f32[4,8,32], index: 3, kind: input, shape index: {}]
  %s4 = inlined_call_operand.vmem [shape: f32[32,128], index: 4, kind: input, shape index: {}]
  %s5 = inlined_call_operand.vmem [shape: f32[128,32], index: 5, kind: input, shape index: {}]
  %s6 = inlined_call_operand.vmem [shape: f32[8,128], index: 6, kind: input, shape index: {}]
  %s7 = inlined_call_operand.hbm [shape: f32[16,32], index: 7, kind: output, shape index: {}]
  %s8 = sld [smem:[#allocation0]]
  $region38: #{tpu_custom_call.1} parent=0
    _
  %s10 = ssub.s32 1, %s8
  %s11 = scalar_select 0, %s10, %s8
  $region1: #{tpu_custom_call.1} parent=0
    #allocation2 [shape = 'u8[8192]{0}', space=vmem, size = 0x2000, scoped, tag = 'output window, operand 0, single buffered']
    #allocation3 [shape = 's32[1]{0}', space=sflag, size = 0x4, scoped, tag = 'scoped memory for tpu_custom_call.1']
    %12 = vsyncpa [#allocation3], 0
    // Predicated region
    $region2: #{tpu_custom_call.1} parent=1 // pred_check
      _
    $region3: #{tpu_custom_call.1} parent=1 // pred_check_branch
      %14 = sbr.rel (0) target = $region5
    $region4: #{tpu_custom_call.1} parent=1 // pred_region
      _
    $region5: #{tpu_custom_call.1} parent=1 // pred_fallthru
      _
    // Predicated region
    $region6: #{tpu_custom_call.1} parent=1 // pred_check
      _
    $region7: #{tpu_custom_call.1} parent=1 // pred_check_branch
      %16 = sbr.rel (0) target = $region9
    $region8: #{tpu_custom_call.1} parent=1 // pred_region
      _
    $region9: #{tpu_custom_call.1} parent=1 // pred_fallthru
      _
    // Predicated region
    $region10: #{tpu_custom_call.1} parent=1 // pred_check
      _
    $region11: #{tpu_custom_call.1} parent=1 // pred_check_branch
      %18 = sbr.rel (0) target = $region13
    $region12: #{tpu_custom_call.1} parent=1 // pred_region
      _
    $region13: #{tpu_custom_call.1} parent=1 // pred_fallthru
      _
    // Predicated region
    $region14: #{tpu_custom_call.1} parent=1 // pred_check
      _
    $region15: #{tpu_custom_call.1} parent=1 // pred_check_branch
      %20 = sbr.rel (0) target = $region17
    $region16: #{tpu_custom_call.1} parent=1 // pred_region
      _
    $region17: #{tpu_custom_call.1} parent=1 // pred_fallthru
      _
    // Predicated region
    $region18: #{tpu_custom_call.1} parent=1 // pred_check
      _
    $region19: #{tpu_custom_call.1} parent=1 // pred_check_branch
      %22 = sbr.rel (0) target = $region21
    $region20: #{tpu_custom_call.1} parent=1 // pred_region
      _
    $region21: #{tpu_custom_call.1} parent=1 // pred_fallthru
      _
    // Predicated region
    $region22: #{tpu_custom_call.1} parent=1 // pred_check
      _
    $region23: #{tpu_custom_call.1} parent=1 // pred_check_branch
      %24 = sbr.rel (0) target = $region25
    $region24: #{tpu_custom_call.1} parent=1 // pred_region
      _
    $region25: #{tpu_custom_call.1} parent=1 // pred_fallthru
      _
    // Predicated region
    $region26: #{tpu_custom_call.1} parent=1 // pred_check
      _
    $region27: #{tpu_custom_call.1} parent=1 // pred_check_branch
      %26 = sbr.rel (0) target = $region29
    $region28: #{tpu_custom_call.1} parent=1 // pred_region
      _
    $region29: #{tpu_custom_call.1} parent=1 // pred_fallthru
      _
    %v27 = vld [vmem:[%s0] sm:$0xff]
    %v28 = vld [vmem:[%s0 + $0x8] sm:$0xff]
    %v29 = vld [vmem:[%s6] sm:$0xff]
    %v30 = vld [vmem:[%s2] sm:$0xff]
    %v31 = vld [vmem:[%s2 + $0x8] sm:$0xff]
    %v32 = vld [vmem:[%s2 + $0x10] sm:$0xff]
    %v33 = vld [vmem:[%s2 + $0x18] sm:$0xff]
    %v34 = vlaneseq
    %v35 = vshrl.u32 %v34, 7
    %v36 = vsub.s32 0, %v35
    %v37 = vrot.slane %v29, %v36
    %vm38 = vcmask 261120
    %v40 = vsel %vm38, %v27, 0
    %v43 = vsel %vm38, %v28, 0
    %45 = vmatprep.subr.mxu0 0.0
    %46 = vmatpush1.msra.mxu0 %v30
    %47 = vmatprep.subr.mxu0 0.0
    %48 = vmatpush1.msra.mxu0 %v31
    %49 = vmatprep.subr.mxu0 0.0
    %50 = vmatpush1.msra.mxu0 %v32
    %51 = vmatprep.subr.mxu0 0.0
    %52 = vmatpush1.msra.mxu0 %v33
    %53 = vmatprep.subr.mxu0 0.0
    %54 = vmatpush1.msra.mxu0 0.0
    %55 = vmatprep.subr.mxu0 0.0
    %56 = vmatpush1.msra.mxu0 0.0
    %57 = vmatprep.subr.mxu0 0.0
    %58 = vmatpush1.msra.mxu0 0.0
    %59 = vmatprep.subr.mxu0 0.0
    %60 = vmatpush1.msra.mxu0 0.0
    %61 = vmatprep.subr.mxu0 0.0
    %62 = vmatpush1.msra.mxu0 0.0
    %63 = vmatprep.subr.mxu0 0.0
    %64 = vmatpush1.msra.mxu0 0.0
    %65 = vmatprep.subr.mxu0 0.0
    %66 = vmatpush1.msra.mxu0 0.0
    %67 = vmatprep.subr.mxu0 0.0
    %68 = vmatpush1.msra.mxu0 0.0
    %69 = vmatprep.subr.mxu0 0.0
    %70 = vmatpush1.msra.mxu0 0.0
    %71 = vmatprep.subr.mxu0 0.0
    %72 = vmatpush1.msra.mxu0 0.0
    %73 = vmatprep.subr.mxu0 0.0
    %74 = vmatpush1.msra.mxu0 0.0
    %75 = vmatprep.subr.mxu0 0.0
    %76 = vmatpush1.msra.mxu0 0.0
    %77 = vmatprep.subr.mxu0 0.0
    %78 = vmatpush1.msra.mxu0 0.0
    %79 = vmatprep.subr.mxu0 0.0
    %80 = vmatpush1.msra.mxu0 0.0
    %81 = vmatprep.subr.mxu0 0.0
    %82 = vmatpush1.msra.mxu0 0.0
    %83 = vmatprep.subr.mxu0 0.0
    %84 = vmatpush1.msra.mxu0 0.0
    %85 = vmatprep.subr.mxu0 0.0
    %86 = vmatpush1.msra.mxu0 0.0
    %87 = vmatprep.subr.mxu0 0.0
    %88 = vmatpush1.msra.mxu0 0.0
    %89 = vmatprep.subr.mxu0 0.0
    %90 = vmatpush1.msra.mxu0 0.0
    %91 = vmatprep.subr.mxu0 0.0
    %92 = vmatpush1.msra.mxu0 0.0
    %93 = vmatprep.subr.mxu0 0.0
    %94 = vmatpush1.msra.mxu0 0.0
    %95 = vmatprep.subr.mxu0 0.0
    %96 = vmatpush1.msra.mxu0 0.0
    %97 = vmatprep.subr.mxu0 0.0
    %98 = vmatpush1.msra.mxu0 0.0
    %99 = vmatprep.subr.mxu0 0.0
    %100 = vmatpush1.msra.mxu0 0.0
    %101 = vmatprep.subr.mxu0 0.0
    %102 = vmatpush1.msra.mxu0 0.0
    %103 = vmatprep.subr.mxu0 0.0
    %104 = vmatpush1.msra.mxu0 0.0
    %105 = vmatprep.subr.mxu0 0.0
    %106 = vmatpush1.msra.mxu0 0.0
    %107 = vmatprep.subr.mxu0 0.0
    %108 = vmatpush1.msra.mxu0 0.0
    %109 = vmatprep.mubr.f32.mxu0 0.0
    %110 = vmatmul.mubr.f32.gmra.mrb[0].mxu0 %v40
    %v111 = vpop.f32.mrb[0].mxu0
    %v112 = vadd.f32 %v37, %v111
    %v113 = vpop.f32.mrb[0].mxu0
    %114 = vmatprep.mubr.f32.mxu0 0.0
    %115 = vmatmul.mubr.f32.gmra.mrb[0].mxu0 %v43
    %v116 = vpop.f32.mrb[0].mxu0
    %v117 = vadd.f32 %v37, %v116
    %v118 = vpop.f32.mrb[0].mxu0
    %119 = vdwg.mxu0
    %v120 = vld [vmem:[%s3] sm:$0xff]
    %v121 = vld [vmem:[%s3 + $0x8] sm:$0xff]
    %v122 = vld [vmem:[%s3 + $0x10] sm:$0xff]
    %v123 = vld [vmem:[%s3 + $0x18] sm:$0xff]
    %125 = vrot.lane.b32.xlu0 %v112, 120
    %v126 = vpop.permute.xlu0 %125
    %127 = vrot.lane.b32.xlu0 %v112, 112
    %v128 = vpop.permute.xlu0 %127
    %129 = vrot.lane.b32.xlu0 %v112, 104
    %v130 = vpop.permute.xlu0 %129
    %v131 = vld [vmem:[%s1] sm:$0x1]
    %132 = vrot.lane.b32.xlu0 %v112, 96
    %v133 = vpop.permute.xlu0 %132
    %vm134 = vcmask 64512
    %v135 = vsel %vm134, %v112, 0
    %v137 = vsel %vm134, %v133, 0
    %139 = vmatprep.subr.mxu0 0.0
    %140 = vmatpush1.xpose.msra.mxu0 %v137
    %141 = vmatprep.subr.mxu0 0.0
    %142 = vmatpush1.xpose.msra.mxu0 0.0
    %143 = vmatprep.subr.mxu0 0.0
    %144 = vmatpush1.xpose.msra.mxu0 0.0
    %145 = vmatprep.subr.mxu0 0.0
    %146 = vmatpush1.xpose.msra.mxu0 0.0
    %147 = vmatprep.subr.mxu0 0.0
    %148 = vmatpush1.xpose.msra.mxu0 0.0
    %149 = vmatprep.subr.mxu0 0.0
    %150 = vmatpush1.xpose.msra.mxu0 0.0
    %151 = vmatprep.subr.mxu0 0.0
    %152 = vmatpush1.xpose.msra.mxu0 0.0
    %153 = vmatprep.subr.mxu0 0.0
    %154 = vmatpush1.xpose.msra.mxu0 0.0
    %155 = vmatprep.subr.mxu0 0.0
    %156 = vmatpush1.xpose.msra.mxu0 0.0
    %157 = vmatprep.subr.mxu0 0.0
    %158 = vmatpush1.xpose.msra.mxu0 0.0
    %159 = vmatprep.subr.mxu0 0.0
    %160 = vmatpush1.xpose.msra.mxu0 0.0
    %161 = vmatprep.subr.mxu0 0.0
    %162 = vmatpush1.xpose.msra.mxu0 0.0
    %163 = vmatprep.subr.mxu0 0.0
    %164 = vmatpush1.xpose.msra.mxu0 0.0
    %165 = vmatprep.subr.mxu0 0.0
    %166 = vmatpush1.xpose.msra.mxu0 0.0
    %167 = vmatprep.subr.mxu0 0.0
    %168 = vmatpush1.xpose.msra.mxu0 0.0
    %169 = vmatprep.subr.mxu0 0.0
    %170 = vmatpush1.xpose.msra.mxu0 0.0
    %171 = vmatprep.subr.mxu0 0.0
    %172 = vmatpush1.xpose.msra.mxu0 0.0
    %173 = vmatprep.subr.mxu0 0.0
    %174 = vmatpush1.xpose.msra.mxu0 0.0
    %175 = vmatprep.subr.mxu0 0.0
    %176 = vmatpush1.xpose.msra.mxu0 0.0
    %177 = vmatprep.subr.mxu0 0.0
    %178 = vmatpush1.xpose.msra.mxu0 0.0
    %179 = vmatprep.subr.mxu0 0.0
    %180 = vmatpush1.xpose.msra.mxu0 0.0
    %181 = vmatprep.subr.mxu0 0.0
    %182 = vmatpush1.xpose.msra.mxu0 0.0
    %183 = vmatprep.subr.mxu0 0.0
    %184 = vmatpush1.xpose.msra.mxu0 0.0
    %185 = vmatprep.subr.mxu0 0.0
    %186 = vmatpush1.xpose.msra.mxu0 0.0
    %187 = vmatprep.subr.mxu0 0.0
    %188 = vmatpush1.xpose.msra.mxu0 0.0
    %189 = vmatprep.subr.mxu0 0.0
    %190 = vmatpush1.xpose.msra.mxu0 0.0
    %191 = vmatprep.subr.mxu0 0.0
    %192 = vmatpush1.xpose.msra.mxu0 0.0
    %193 = vmatprep.subr.mxu0 0.0
    %194 = vmatpush1.xpose.msra.mxu0 0.0
    %195 = vmatprep.subr.mxu0 0.0
    %196 = vmatpush1.xpose.msra.mxu0 0.0
    %197 = vmatprep.subr.mxu0 0.0
    %198 = vmatpush1.xpose.msra.mxu0 0.0
    %199 = vmatprep.subr.mxu0 0.0
    %200 = vmatpush1.xpose.msra.mxu0 0.0
    %201 = vmatprep.subr.mxu0 0.0
    %202 = vmatpush1.xpose.msra.mxu0 0.0
    %203 = vmatprep.mubr.f32.mxu0 0.0
    %204 = vmatmul.mubr.f32.gmra.mrb[0].mxu0 %v135
    %v205 = vpop.f32.mrb[0].mxu0
    %v206 = vadd.f32 0.0, %v205
    %v207 = vpop.f32.mrb[0].mxu0
    %208 = vdwg.mxu0
    %209 = vrot.lane.b32.xlu0 %v126, 96
    %v210 = vpop.permute.xlu0 %209
    %v211 = vsel %vm134, %v126, 0
    %v213 = vsel %vm134, %v210, 0
    %215 = vmatprep.subr.mxu0 0.0
    %216 = vmatpush1.xpose.msra.mxu0 %v213
    %217 = vmatprep.subr.mxu0 0.0
    %218 = vmatpush1.xpose.msra.mxu0 0.0
    %219 = vmatprep.subr.mxu0 0.0
    %220 = vmatpush1.xpose.msra.mxu0 0.0
    %221 = vmatprep.subr.mxu0 0.0
    %222 = vmatpush1.xpose.msra.mxu0 0.0
    %223 = vmatprep.subr.mxu0 0.0
    %224 = vmatpush1.xpose.msra.mxu0 0.0
    %225 = vmatprep.subr.mxu0 0.0
    %226 = vmatpush1.xpose.msra.mxu0 0.0
    %227 = vmatprep.subr.mxu0 0.0
    %228 = vmatpush1.xpose.msra.mxu0 0.0
    %229 = vmatprep.subr.mxu0 0.0
    %230 = vmatpush1.xpose.msra.mxu0 0.0
    %231 = vmatprep.subr.mxu0 0.0
    %232 = vmatpush1.xpose.msra.mxu0 0.0
    %233 = vmatprep.subr.mxu0 0.0
    %234 = vmatpush1.xpose.msra.mxu0 0.0
    %235 = vmatprep.subr.mxu0 0.0
    %236 = vmatpush1.xpose.msra.mxu0 0.0
    %237 = vmatprep.subr.mxu0 0.0
    %238 = vmatpush1.xpose.msra.mxu0 0.0
    %239 = vmatprep.subr.mxu0 0.0
    %240 = vmatpush1.xpose.msra.mxu0 0.0
    %241 = vmatprep.subr.mxu0 0.0
    %242 = vmatpush1.xpose.msra.mxu0 0.0
    %243 = vmatprep.subr.mxu0 0.0
    %244 = vmatpush1.xpose.msra.mxu0 0.0
    %245 = vmatprep.subr.mxu0 0.0
    %246 = vmatpush1.xpose.msra.mxu0 0.0
    %247 = vmatprep.subr.mxu0 0.0
    %248 = vmatpush1.xpose.msra.mxu0 0.0
    %249 = vmatprep.subr.mxu0 0.0
    %250 = vmatpush1.xpose.msra.mxu0 0.0
    %251 = vmatprep.subr.mxu0 0.0
    %252 = vmatpush1.xpose.msra.mxu0 0.0
    %253 = vmatprep.subr.mxu0 0.0
    %254 = vmatpush1.xpose.msra.mxu0 0.0
    %255 = vmatprep.subr.mxu0 0.0
    %256 = vmatpush1.xpose.msra.mxu0 0.0
    %257 = vmatprep.subr.mxu0 0.0
    %258 = vmatpush1.xpose.msra.mxu0 0.0
    %259 = vmatprep.subr.mxu0 0.0
    %260 = vmatpush1.xpose.msra.mxu0 0.0
    %261 = vmatprep.subr.mxu0 0.0
    %262 = vmatpush1.xpose.msra.mxu0 0.0
    %263 = vmatprep.subr.mxu0 0.0
    %264 = vmatpush1.xpose.msra.mxu0 0.0
    %265 = vmatprep.subr.mxu0 0.0
    %266 = vmatpush1.xpose.msra.mxu0 0.0
    %267 = vmatprep.subr.mxu0 0.0
    %268 = vmatpush1.xpose.msra.mxu0 0.0
    %269 = vmatprep.subr.mxu0 0.0
    %270 = vmatpush1.xpose.msra.mxu0 0.0
    %271 = vmatprep.subr.mxu0 0.0
    %272 = vmatpush1.xpose.msra.mxu0 0.0
    %273 = vmatprep.subr.mxu0 0.0
    %274 = vmatpush1.xpose.msra.mxu0 0.0
    %275 = vmatprep.subr.mxu0 0.0
    %276 = vmatpush1.xpose.msra.mxu0 0.0
    %277 = vmatprep.subr.mxu0 0.0
    %278 = vmatpush1.xpose.msra.mxu0 0.0
    %279 = vmatprep.mubr.f32.mxu0 0.0
    %280 = vmatmul.mubr.f32.gmra.mrb[0].mxu0 %v211
    %v281 = vpop.f32.mrb[0].mxu0
    %v282 = vadd.f32 0.0, %v281
    %v283 = vpop.f32.mrb[0].mxu0
    %284 = vdwg.mxu0
    %285 = vrot.lane.b32.xlu0 %v128, 96
    %v286 = vpop.permute.xlu0 %285
    %v287 = vsel %vm134, %v128, 0
    %v289 = vsel %vm134, %v286, 0
    %291 = vmatprep.subr.mxu0 0.0
    %292 = vmatpush1.xpose.msra.mxu0 %v289
    %293 = vmatprep.subr.mxu0 0.0
    %294 = vmatpush1.xpose.msra.mxu0 0.0
    %295 = vmatprep.subr.mxu0 0.0
    %296 = vmatpush1.xpose.msra.mxu0 0.0
    %297 = vmatprep.subr.mxu0 0.0
    %298 = vmatpush1.xpose.msra.mxu0 0.0
    %299 = vmatprep.subr.mxu0 0.0
    %300 = vmatpush1.xpose.msra.mxu0 0.0
    %301 = vmatprep.subr.mxu0 0.0
    %302 = vmatpush1.xpose.msra.mxu0 0.0
    %303 = vmatprep.subr.mxu0 0.0
    %304 = vmatpush1.xpose.msra.mxu0 0.0
    %305 = vmatprep.subr.mxu0 0.0
    %306 = vmatpush1.xpose.msra.mxu0 0.0
    %307 = vmatprep.subr.mxu0 0.0
    %308 = vmatpush1.xpose.msra.mxu0 0.0
    %309 = vmatprep.subr.mxu0 0.0
    %310 = vmatpush1.xpose.msra.mxu0 0.0
    %311 = vmatprep.subr.mxu0 0.0
    %312 = vmatpush1.xpose.msra.mxu0 0.0
    %313 = vmatprep.subr.mxu0 0.0
    %314 = vmatpush1.xpose.msra.mxu0 0.0
    %315 = vmatprep.subr.mxu0 0.0
    %316 = vmatpush1.xpose.msra.mxu0 0.0
    %317 = vmatprep.subr.mxu0 0.0
    %318 = vmatpush1.xpose.msra.mxu0 0.0
    %319 = vmatprep.subr.mxu0 0.0
    %320 = vmatpush1.xpose.msra.mxu0 0.0
    %321 = vmatprep.subr.mxu0 0.0
    %322 = vmatpush1.xpose.msra.mxu0 0.0
    %323 = vmatprep.subr.mxu0 0.0
    %324 = vmatpush1.xpose.msra.mxu0 0.0
    %325 = vmatprep.subr.mxu0 0.0
    %326 = vmatpush1.xpose.msra.mxu0 0.0
    %327 = vmatprep.subr.mxu0 0.0
    %328 = vmatpush1.xpose.msra.mxu0 0.0
    %329 = vmatprep.subr.mxu0 0.0
    %330 = vmatpush1.xpose.msra.mxu0 0.0
    %331 = vmatprep.subr.mxu0 0.0
    %332 = vmatpush1.xpose.msra.mxu0 0.0
    %333 = vmatprep.subr.mxu0 0.0
    %334 = vmatpush1.xpose.msra.mxu0 0.0
    %335 = vmatprep.subr.mxu0 0.0
    %336 = vmatpush1.xpose.msra.mxu0 0.0
    %337 = vmatprep.subr.mxu0 0.0
    %338 = vmatpush1.xpose.msra.mxu0 0.0
    %339 = vmatprep.subr.mxu0 0.0
    %340 = vmatpush1.xpose.msra.mxu0 0.0
    %341 = vmatprep.subr.mxu0 0.0
    %342 = vmatpush1.xpose.msra.mxu0 0.0
    %343 = vmatprep.subr.mxu0 0.0
    %344 = vmatpush1.xpose.msra.mxu0 0.0
    %345 = vmatprep.subr.mxu0 0.0
    %346 = vmatpush1.xpose.msra.mxu0 0.0
    %347 = vmatprep.subr.mxu0 0.0
    %348 = vmatpush1.xpose.msra.mxu0 0.0
    %349 = vmatprep.subr.mxu0 0.0
    %350 = vmatpush1.xpose.msra.mxu0 0.0
    %351 = vmatprep.subr.mxu0 0.0
    %352 = vmatpush1.xpose.msra.mxu0 0.0
    %353 = vmatprep.subr.mxu0 0.0
    %354 = vmatpush1.xpose.msra.mxu0 0.0
    %355 = vmatprep.mubr.f32.mxu0 0.0
    %356 = vmatmul.mubr.f32.gmra.mrb[0].mxu0 %v287
    %v357 = vpop.f32.mrb[0].mxu0
    %v358 = vadd.f32 0.0, %v357
    %v359 = vpop.f32.mrb[0].mxu0
    %360 = vdwg.mxu0
    %361 = vrot.lane.b32.xlu0 %v130, 96
    %v362 = vpop.permute.xlu0 %361
    %v363 = vsel %vm134, %v130, 0
    %v365 = vsel %vm134, %v362, 0
    %367 = vmatprep.subr.mxu0 0.0
    %368 = vmatpush1.xpose.msra.mxu0 %v365
    %369 = vmatprep.subr.mxu0 0.0
    %370 = vmatpush1.xpose.msra.mxu0 0.0
    %371 = vmatprep.subr.mxu0 0.0
    %372 = vmatpush1.xpose.msra.mxu0 0.0
    %373 = vmatprep.subr.mxu0 0.0
    %374 = vmatpush1.xpose.msra.mxu0 0.0
    %375 = vmatprep.subr.mxu0 0.0
    %376 = vmatpush1.xpose.msra.mxu0 0.0
    %377 = vmatprep.subr.mxu0 0.0
    %378 = vmatpush1.xpose.msra.mxu0 0.0
    %379 = vmatprep.subr.mxu0 0.0
    %380 = vmatpush1.xpose.msra.mxu0 0.0
    %381 = vmatprep.subr.mxu0 0.0
    %382 = vmatpush1.xpose.msra.mxu0 0.0
    %383 = vmatprep.subr.mxu0 0.0
    %384 = vmatpush1.xpose.msra.mxu0 0.0
    %385 = vmatprep.subr.mxu0 0.0
    %386 = vmatpush1.xpose.msra.mxu0 0.0
    %387 = vmatprep.subr.mxu0 0.0
    %388 = vmatpush1.xpose.msra.mxu0 0.0
    %389 = vmatprep.subr.mxu0 0.0
    %390 = vmatpush1.xpose.msra.mxu0 0.0
    %391 = vmatprep.subr.mxu0 0.0
    %392 = vmatpush1.xpose.msra.mxu0 0.0
    %393 = vmatprep.subr.mxu0 0.0
    %394 = vmatpush1.xpose.msra.mxu0 0.0
    %395 = vmatprep.subr.mxu0 0.0
    %396 = vmatpush1.xpose.msra.mxu0 0.0
    %397 = vmatprep.subr.mxu0 0.0
    %398 = vmatpush1.xpose.msra.mxu0 0.0
    %399 = vmatprep.subr.mxu0 0.0
    %400 = vmatpush1.xpose.msra.mxu0 0.0
    %401 = vmatprep.subr.mxu0 0.0
    %402 = vmatpush1.xpose.msra.mxu0 0.0
    %403 = vmatprep.subr.mxu0 0.0
    %404 = vmatpush1.xpose.msra.mxu0 0.0
    %405 = vmatprep.subr.mxu0 0.0
    %406 = vmatpush1.xpose.msra.mxu0 0.0
    %407 = vmatprep.subr.mxu0 0.0
    %408 = vmatpush1.xpose.msra.mxu0 0.0
    %409 = vmatprep.subr.mxu0 0.0
    %410 = vmatpush1.xpose.msra.mxu0 0.0
    %411 = vmatprep.subr.mxu0 0.0
    %412 = vmatpush1.xpose.msra.mxu0 0.0
    %413 = vmatprep.subr.mxu0 0.0
    %414 = vmatpush1.xpose.msra.mxu0 0.0
    %415 = vmatprep.subr.mxu0 0.0
    %416 = vmatpush1.xpose.msra.mxu0 0.0
    %417 = vmatprep.subr.mxu0 0.0
    %418 = vmatpush1.xpose.msra.mxu0 0.0
    %419 = vmatprep.subr.mxu0 0.0
    %420 = vmatpush1.xpose.msra.mxu0 0.0
    %421 = vmatprep.subr.mxu0 0.0
    %422 = vmatpush1.xpose.msra.mxu0 0.0
    %423 = vmatprep.subr.mxu0 0.0
    %424 = vmatpush1.xpose.msra.mxu0 0.0
    %425 = vmatprep.subr.mxu0 0.0
    %426 = vmatpush1.xpose.msra.mxu0 0.0
    %427 = vmatprep.subr.mxu0 0.0
    %428 = vmatpush1.xpose.msra.mxu0 0.0
    %429 = vmatprep.subr.mxu0 0.0
    %430 = vmatpush1.xpose.msra.mxu0 0.0
    %431 = vmatprep.mubr.f32.mxu0 0.0
    %432 = vmatmul.mubr.f32.gmra.mrb[0].mxu0 %v363
    %v433 = vpop.f32.mrb[0].mxu0
    %v434 = vadd.f32 0.0, %v433
    %v435 = vpop.f32.mrb[0].mxu0
    %436 = vdwg.mxu0
    %v437 = vmul.f32 %v206, 0.35355338
    %v438 = vmul.f32 %v282, 0.35355338
    %v439 = vmul.f32 %v358, 0.35355338
    %v440 = vmul.f32 %v434, 0.35355338
    %v442 = vlaneseq
    %v443 = vshrl.u32 %v442, 7
    %v444 = vsub.s32 0, %v443
    %v445 = vrot.slane %v131, %v444
    %v447 = vadd.f32 %v437, %v445
    %v448 = vadd.f32 %v438, %v445
    %v449 = vadd.f32 %v439, %v445
    %v450 = vadd.f32 %v440, %v445
    %v451 = vsel %vm134, %v447, -inf
    %452 = vmax.xlane.f32.xlu0 %v451
    %v453 = vpop.xlane.xlu0 %452
    %v454 = vsel %vm134, %v448, -inf
    %455 = vmax.xlane.f32.xlu0 %v454
    %v456 = vpop.xlane.xlu0 %455
    %v457 = vsel %vm134, %v449, -inf
    %458 = vmax.xlane.f32.xlu0 %v457
    %v459 = vpop.xlane.xlu0 %458
    %v460 = vsel %vm134, %v450, -inf
    %461 = vmax.xlane.f32.xlu0 %v460
    %v462 = vpop.xlane.xlu0 %461
    %v463 = vsub.f32 %v447, %v453
    %v464 = vsub.f32 %v448, %v456
    %v465 = vsub.f32 %v449, %v459
    %v466 = vsub.f32 %v450, %v462
    %v467 = vmul.f32 %v463, 1.442695
    %v468 = vpow.pop %v467
    %v469 = vmul.f32 %v464, 1.442695
    %v470 = vpow.pop %v469
    %v471 = vmul.f32 %v465, 1.442695
    %v472 = vpow.pop %v471
    %v473 = vmul.f32 %v466, 1.442695
    %v474 = vpow.pop %v473
    %v475 = vsel %vm134, %v468, 0.0
    %476 = vadd.xlane.f32.xlu0 %v475
    %v477 = vpop.xlane.xlu0 %476
    %v478 = vsel %vm134, %v470, 0.0
    %479 = vadd.xlane.f32.xlu0 %v478
    %v480 = vpop.xlane.xlu0 %479
    %v481 = vsel %vm134, %v472, 0.0
    %482 = vadd.xlane.f32.xlu0 %v481
    %v483 = vpop.xlane.xlu0 %482
    %v484 = vsel %vm134, %v474, 0.0
    %485 = vadd.xlane.f32.xlu0 %v484
    %v486 = vpop.xlane.xlu0 %485
    %v487 = vrcp.pop %v477
    %v488 = vrcp.pop %v480
    %v489 = vrcp.pop %v483
    %v490 = vrcp.pop %v486
    %v491 = vmul.f32 %v468, %v487
    %v492 = vmul.f32 %v470, %v488
    %v493 = vmul.f32 %v472, %v489
    %v494 = vmul.f32 %v474, %v490
    %495 = vrot.lane.b32.xlu0 %v112, 64
    %v496 = vpop.permute.xlu0 %495
    %v499 = vsel %vm134, %v491, 0
    %501 = vmatprep.subr.mxu0 0.0
    %502 = vmatpush1.msra.mxu0 %v496
    %503 = vmatprep.subr.mxu0 0.0
    %504 = vmatpush1.msra.mxu0 0.0
    %505 = vmatprep.subr.mxu0 0.0
    %506 = vmatpush1.msra.mxu0 0.0
    %507 = vmatprep.subr.mxu0 0.0
    %508 = vmatpush1.msra.mxu0 0.0
    %509 = vmatprep.subr.mxu0 0.0
    %510 = vmatpush1.msra.mxu0 0.0
    %511 = vmatprep.subr.mxu0 0.0
    %512 = vmatpush1.msra.mxu0 0.0
    %513 = vmatprep.subr.mxu0 0.0
    %514 = vmatpush1.msra.mxu0 0.0
    %515 = vmatprep.subr.mxu0 0.0
    %516 = vmatpush1.msra.mxu0 0.0
    %517 = vmatprep.subr.mxu0 0.0
    %518 = vmatpush1.msra.mxu0 0.0
    %519 = vmatprep.subr.mxu0 0.0
    %520 = vmatpush1.msra.mxu0 0.0
    %521 = vmatprep.subr.mxu0 0.0
    %522 = vmatpush1.msra.mxu0 0.0
    %523 = vmatprep.subr.mxu0 0.0
    %524 = vmatpush1.msra.mxu0 0.0
    %525 = vmatprep.subr.mxu0 0.0
    %526 = vmatpush1.msra.mxu0 0.0
    %527 = vmatprep.subr.mxu0 0.0
    %528 = vmatpush1.msra.mxu0 0.0
    %529 = vmatprep.subr.mxu0 0.0
    %530 = vmatpush1.msra.mxu0 0.0
    %531 = vmatprep.subr.mxu0 0.0
    %532 = vmatpush1.msra.mxu0 0.0
    %533 = vmatprep.subr.mxu0 0.0
    %534 = vmatpush1.msra.mxu0 0.0
    %535 = vmatprep.subr.mxu0 0.0
    %536 = vmatpush1.msra.mxu0 0.0
    %537 = vmatprep.subr.mxu0 0.0
    %538 = vmatpush1.msra.mxu0 0.0
    %539 = vmatprep.subr.mxu0 0.0
    %540 = vmatpush1.msra.mxu0 0.0
    %541 = vmatprep.subr.mxu0 0.0
    %542 = vmatpush1.msra.mxu0 0.0
    %543 = vmatprep.subr.mxu0 0.0
    %544 = vmatpush1.msra.mxu0 0.0
    %545 = vmatprep.subr.mxu0 0.0
    %546 = vmatpush1.msra.mxu0 0.0
    %547 = vmatprep.subr.mxu0 0.0
    %548 = vmatpush1.msra.mxu0 0.0
    %549 = vmatprep.subr.mxu0 0.0
    %550 = vmatpush1.msra.mxu0 0.0
    %551 = vmatprep.subr.mxu0 0.0
    %552 = vmatpush1.msra.mxu0 0.0
    %553 = vmatprep.subr.mxu0 0.0
    %554 = vmatpush1.msra.mxu0 0.0
    %555 = vmatprep.subr.mxu0 0.0
    %556 = vmatpush1.msra.mxu0 0.0
    %557 = vmatprep.subr.mxu0 0.0
    %558 = vmatpush1.msra.mxu0 0.0
    %559 = vmatprep.subr.mxu0 0.0
    %560 = vmatpush1.msra.mxu0 0.0
    %561 = vmatprep.subr.mxu0 0.0
    %562 = vmatpush1.msra.mxu0 0.0
    %563 = vmatprep.subr.mxu0 0.0
    %564 = vmatpush1.msra.mxu0 0.0
    %565 = vmatprep.mubr.f32.mxu0 0.0
    %566 = vmatmul.mubr.f32.gmra.mrb[0].mxu0 %v499
    %v567 = vpop.f32.mrb[0].mxu0
    %v568 = vadd.f32 0.0, %v567
    %v569 = vpop.f32.mrb[0].mxu0
    %570 = vdwg.mxu0
    %571 = vrot.lane.b32.xlu0 %v126, 64
    %v572 = vpop.permute.xlu0 %571
    %v575 = vsel %vm134, %v492, 0
    %577 = vmatprep.subr.mxu0 0.0
    %578 = vmatpush1.msra.mxu0 %v572
    %579 = vmatprep.subr.mxu0 0.0
    %580 = vmatpush1.msra.mxu0 0.0
    %581 = vmatprep.subr.mxu0 0.0
    %582 = vmatpush1.msra.mxu0 0.0
    %583 = vmatprep.subr.mxu0 0.0
    %584 = vmatpush1.msra.mxu0 0.0
    %585 = vmatprep.subr.mxu0 0.0
    %586 = vmatpush1.msra.mxu0 0.0
    %587 = vmatprep.subr.mxu0 0.0
    %588 = vmatpush1.msra.mxu0 0.0
    %589 = vmatprep.subr.mxu0 0.0
    %590 = vmatpush1.msra.mxu0 0.0
    %591 = vmatprep.subr.mxu0 0.0
    %592 = vmatpush1.msra.mxu0 0.0
    %593 = vmatprep.subr.mxu0 0.0
    %594 = vmatpush1.msra.mxu0 0.0
    %595 = vmatprep.subr.mxu0 0.0
    %596 = vmatpush1.msra.mxu0 0.0
    %597 = vmatprep.subr.mxu0 0.0
    %598 = vmatpush1.msra.mxu0 0.0
    %599 = vmatprep.subr.mxu0 0.0
    %600 = vmatpush1.msra.mxu0 0.0
    %601 = vmatprep.subr.mxu0 0.0
    %602 = vmatpush1.msra.mxu0 0.0
    %603 = vmatprep.subr.mxu0 0.0
    %604 = vmatpush1.msra.mxu0 0.0
    %605 = vmatprep.subr.mxu0 0.0
    %606 = vmatpush1.msra.mxu0 0.0
    %607 = vmatprep.subr.mxu0 0.0
    %608 = vmatpush1.msra.mxu0 0.0
    %609 = vmatprep.subr.mxu0 0.0
    %610 = vmatpush1.msra.mxu0 0.0
    %611 = vmatprep.subr.mxu0 0.0
    %612 = vmatpush1.msra.mxu0 0.0
    %613 = vmatprep.subr.mxu0 0.0
    %614 = vmatpush1.msra.mxu0 0.0
    %615 = vmatprep.subr.mxu0 0.0
    %616 = vmatpush1.msra.mxu0 0.0
    %617 = vmatprep.subr.mxu0 0.0
    %618 = vmatpush1.msra.mxu0 0.0
    %619 = vmatprep.subr.mxu0 0.0
    %620 = vmatpush1.msra.mxu0 0.0
    %621 = vmatprep.subr.mxu0 0.0
    %622 = vmatpush1.msra.mxu0 0.0
    %623 = vmatprep.subr.mxu0 0.0
    %624 = vmatpush1.msra.mxu0 0.0
    %625 = vmatprep.subr.mxu0 0.0
    %626 = vmatpush1.msra.mxu0 0.0
    %627 = vmatprep.subr.mxu0 0.0
    %628 = vmatpush1.msra.mxu0 0.0
    %629 = vmatprep.subr.mxu0 0.0
    %630 = vmatpush1.msra.mxu0 0.0
    %631 = vmatprep.subr.mxu0 0.0
    %632 = vmatpush1.msra.mxu0 0.0
    %633 = vmatprep.subr.mxu0 0.0
    %634 = vmatpush1.msra.mxu0 0.0
    %635 = vmatprep.subr.mxu0 0.0
    %636 = vmatpush1.msra.mxu0 0.0
    %637 = vmatprep.subr.mxu0 0.0
    %638 = vmatpush1.msra.mxu0 0.0
    %639 = vmatprep.subr.mxu0 0.0
    %640 = vmatpush1.msra.mxu0 0.0
    %641 = vmatprep.mubr.f32.mxu0 0.0
    %642 = vmatmul.mubr.f32.gmra.mrb[0].mxu0 %v575
    %v643 = vpop.f32.mrb[0].mxu0
    %v644 = vadd.f32 0.0, %v643
    %v645 = vpop.f32.mrb[0].mxu0
    %646 = vdwg.mxu0
    %647 = vrot.lane.b32.xlu0 %v128, 64
    %v648 = vpop.permute.xlu0 %647
    %v651 = vsel %vm134, %v493, 0
    %653 = vmatprep.subr.mxu0 0.0
    %654 = vmatpush1.msra.mxu0 %v648
    %655 = vmatprep.subr.mxu0 0.0
    %656 = vmatpush1.msra.mxu0 0.0
    %657 = vmatprep.subr.mxu0 0.0
    %658 = vmatpush1.msra.mxu0 0.0
    %659 = vmatprep.subr.mxu0 0.0
    %660 = vmatpush1.msra.mxu0 0.0
    %661 = vmatprep.subr.mxu0 0.0
    %662 = vmatpush1.msra.mxu0 0.0
    %663 = vmatprep.subr.mxu0 0.0
    %664 = vmatpush1.msra.mxu0 0.0
    %665 = vmatprep.subr.mxu0 0.0
    %666 = vmatpush1.msra.mxu0 0.0
    %667 = vmatprep.subr.mxu0 0.0
    %668 = vmatpush1.msra.mxu0 0.0
    %669 = vmatprep.subr.mxu0 0.0
    %670 = vmatpush1.msra.mxu0 0.0
    %671 = vmatprep.subr.mxu0 0.0
    %672 = vmatpush1.msra.mxu0 0.0
    %673 = vmatprep.subr.mxu0 0.0
    %674 = vmatpush1.msra.mxu0 0.0
    %675 = vmatprep.subr.mxu0 0.0
    %676 = vmatpush1.msra.mxu0 0.0
    %677 = vmatprep.subr.mxu0 0.0
    %678 = vmatpush1.msra.mxu0 0.0
    %679 = vmatprep.subr.mxu0 0.0
    %680 = vmatpush1.msra.mxu0 0.0
    %681 = vmatprep.subr.mxu0 0.0
    %682 = vmatpush1.msra.mxu0 0.0
    %683 = vmatprep.subr.mxu0 0.0
    %684 = vmatpush1.msra.mxu0 0.0
    %685 = vmatprep.subr.mxu0 0.0
    %686 = vmatpush1.msra.mxu0 0.0
    %687 = vmatprep.subr.mxu0 0.0
    %688 = vmatpush1.msra.mxu0 0.0
    %689 = vmatprep.subr.mxu0 0.0
    %690 = vmatpush1.msra.mxu0 0.0
    %691 = vmatprep.subr.mxu0 0.0
    %692 = vmatpush1.msra.mxu0 0.0
    %693 = vmatprep.subr.mxu0 0.0
    %694 = vmatpush1.msra.mxu0 0.0
    %695 = vmatprep.subr.mxu0 0.0
    %696 = vmatpush1.msra.mxu0 0.0
    %697 = vmatprep.subr.mxu0 0.0
    %698 = vmatpush1.msra.mxu0 0.0
    %699 = vmatprep.subr.mxu0 0.0
    %700 = vmatpush1.msra.mxu0 0.0
    %701 = vmatprep.subr.mxu0 0.0
    %702 = vmatpush1.msra.mxu0 0.0
    %703 = vmatprep.subr.mxu0 0.0
    %704 = vmatpush1.msra.mxu0 0.0
    %705 = vmatprep.subr.mxu0 0.0
    %706 = vmatpush1.msra.mxu0 0.0
    %707 = vmatprep.subr.mxu0 0.0
    %708 = vmatpush1.msra.mxu0 0.0
    %709 = vmatprep.subr.mxu0 0.0
    %710 = vmatpush1.msra.mxu0 0.0
    %711 = vmatprep.subr.mxu0 0.0
    %712 = vmatpush1.msra.mxu0 0.0
    %713 = vmatprep.subr.mxu0 0.0
    %714 = vmatpush1.msra.mxu0 0.0
    %715 = vmatprep.subr.mxu0 0.0
    %716 = vmatpush1.msra.mxu0 0.0
    %717 = vmatprep.mubr.f32.mxu0 0.0
    %718 = vmatmul.mubr.f32.gmra.mrb[0].mxu0 %v651
    %v719 = vpop.f32.mrb[0].mxu0
    %v720 = vadd.f32 0.0, %v719
    %v721 = vpop.f32.mrb[0].mxu0
    %722 = vdwg.mxu0
    %723 = vrot.lane.b32.xlu0 %v130, 64
    %v724 = vpop.permute.xlu0 %723
    %v727 = vsel %vm134, %v494, 0
    %729 = vmatprep.subr.mxu0 0.0
    %730 = vmatpush1.msra.mxu0 %v724
    %731 = vmatprep.subr.mxu0 0.0
    %732 = vmatpush1.msra.mxu0 0.0
    %733 = vmatprep.subr.mxu0 0.0
    %734 = vmatpush1.msra.mxu0 0.0
    %735 = vmatprep.subr.mxu0 0.0
    %736 = vmatpush1.msra.mxu0 0.0
    %737 = vmatprep.subr.mxu0 0.0
    %738 = vmatpush1.msra.mxu0 0.0
    %739 = vmatprep.subr.mxu0 0.0
    %740 = vmatpush1.msra.mxu0 0.0
    %741 = vmatprep.subr.mxu0 0.0
    %742 = vmatpush1.msra.mxu0 0.0
    %743 = vmatprep.subr.mxu0 0.0
    %744 = vmatpush1.msra.mxu0 0.0
    %745 = vmatprep.subr.mxu0 0.0
    %746 = vmatpush1.msra.mxu0 0.0
    %747 = vmatprep.subr.mxu0 0.0
    %748 = vmatpush1.msra.mxu0 0.0
    %749 = vmatprep.subr.mxu0 0.0
    %750 = vmatpush1.msra.mxu0 0.0
    %751 = vmatprep.subr.mxu0 0.0
    %752 = vmatpush1.msra.mxu0 0.0
    %753 = vmatprep.subr.mxu0 0.0
    %754 = vmatpush1.msra.mxu0 0.0
    %755 = vmatprep.subr.mxu0 0.0
    %756 = vmatpush1.msra.mxu0 0.0
    %757 = vmatprep.subr.mxu0 0.0
    %758 = vmatpush1.msra.mxu0 0.0
    %759 = vmatprep.subr.mxu0 0.0
    %760 = vmatpush1.msra.mxu0 0.0
    %761 = vmatprep.subr.mxu0 0.0
    %762 = vmatpush1.msra.mxu0 0.0
    %763 = vmatprep.subr.mxu0 0.0
    %764 = vmatpush1.msra.mxu0 0.0
    %765 = vmatprep.subr.mxu0 0.0
    %766 = vmatpush1.msra.mxu0 0.0
    %767 = vmatprep.subr.mxu0 0.0
    %768 = vmatpush1.msra.mxu0 0.0
    %769 = vmatprep.subr.mxu0 0.0
    %770 = vmatpush1.msra.mxu0 0.0
    %771 = vmatprep.subr.mxu0 0.0
    %772 = vmatpush1.msra.mxu0 0.0
    %773 = vmatprep.subr.mxu0 0.0
    %774 = vmatpush1.msra.mxu0 0.0
    %775 = vmatprep.subr.mxu0 0.0
    %776 = vmatpush1.msra.mxu0 0.0
    %777 = vmatprep.subr.mxu0 0.0
    %778 = vmatpush1.msra.mxu0 0.0
    %779 = vmatprep.subr.mxu0 0.0
    %780 = vmatpush1.msra.mxu0 0.0
    %781 = vmatprep.subr.mxu0 0.0
    %782 = vmatpush1.msra.mxu0 0.0
    %783 = vmatprep.subr.mxu0 0.0
    %784 = vmatpush1.msra.mxu0 0.0
    %785 = vmatprep.subr.mxu0 0.0
    %786 = vmatpush1.msra.mxu0 0.0
    %787 = vmatprep.subr.mxu0 0.0
    %788 = vmatpush1.msra.mxu0 0.0
    %789 = vmatprep.subr.mxu0 0.0
    %790 = vmatpush1.msra.mxu0 0.0
    %791 = vmatprep.subr.mxu0 0.0
    %792 = vmatpush1.msra.mxu0 0.0
    %793 = vmatprep.mubr.f32.mxu0 0.0
    %794 = vmatmul.mubr.f32.gmra.mrb[0].mxu0 %v727
    %v795 = vpop.f32.mrb[0].mxu0
    %v796 = vadd.f32 0.0, %v795
    %v797 = vpop.f32.mrb[0].mxu0
    %798 = vdwg.mxu0
    %v800 = vsel %vm134, %v568, 0
    %802 = vmatprep.subr.mxu0 0.0
    %803 = vmatpush1.msra.mxu0 %v120
    %804 = vmatprep.subr.mxu0 0.0
    %805 = vmatpush1.msra.mxu0 0.0
    %806 = vmatprep.subr.mxu0 0.0
    %807 = vmatpush1.msra.mxu0 0.0
    %808 = vmatprep.subr.mxu0 0.0
    %809 = vmatpush1.msra.mxu0 0.0
    %810 = vmatprep.subr.mxu0 0.0
    %811 = vmatpush1.msra.mxu0 0.0
    %812 = vmatprep.subr.mxu0 0.0
    %813 = vmatpush1.msra.mxu0 0.0
    %814 = vmatprep.subr.mxu0 0.0
    %815 = vmatpush1.msra.mxu0 0.0
    %816 = vmatprep.subr.mxu0 0.0
    %817 = vmatpush1.msra.mxu0 0.0
    %818 = vmatprep.subr.mxu0 0.0
    %819 = vmatpush1.msra.mxu0 0.0
    %820 = vmatprep.subr.mxu0 0.0
    %821 = vmatpush1.msra.mxu0 0.0
    %822 = vmatprep.subr.mxu0 0.0
    %823 = vmatpush1.msra.mxu0 0.0
    %824 = vmatprep.subr.mxu0 0.0
    %825 = vmatpush1.msra.mxu0 0.0
    %826 = vmatprep.subr.mxu0 0.0
    %827 = vmatpush1.msra.mxu0 0.0
    %828 = vmatprep.subr.mxu0 0.0
    %829 = vmatpush1.msra.mxu0 0.0
    %830 = vmatprep.subr.mxu0 0.0
    %831 = vmatpush1.msra.mxu0 0.0
    %832 = vmatprep.subr.mxu0 0.0
    %833 = vmatpush1.msra.mxu0 0.0
    %834 = vmatprep.subr.mxu0 0.0
    %835 = vmatpush1.msra.mxu0 0.0
    %836 = vmatprep.subr.mxu0 0.0
    %837 = vmatpush1.msra.mxu0 0.0
    %838 = vmatprep.subr.mxu0 0.0
    %839 = vmatpush1.msra.mxu0 0.0
    %840 = vmatprep.subr.mxu0 0.0
    %841 = vmatpush1.msra.mxu0 0.0
    %842 = vmatprep.subr.mxu0 0.0
    %843 = vmatpush1.msra.mxu0 0.0
    %844 = vmatprep.subr.mxu0 0.0
    %845 = vmatpush1.msra.mxu0 0.0
    %846 = vmatprep.subr.mxu0 0.0
    %847 = vmatpush1.msra.mxu0 0.0
    %848 = vmatprep.subr.mxu0 0.0
    %849 = vmatpush1.msra.mxu0 0.0
    %850 = vmatprep.subr.mxu0 0.0
    %851 = vmatpush1.msra.mxu0 0.0
    %852 = vmatprep.subr.mxu0 0.0
    %853 = vmatpush1.msra.mxu0 0.0
    %854 = vmatprep.subr.mxu0 0.0
    %855 = vmatpush1.msra.mxu0 0.0
    %856 = vmatprep.subr.mxu0 0.0
    %857 = vmatpush1.msra.mxu0 0.0
    %858 = vmatprep.subr.mxu0 0.0
    %859 = vmatpush1.msra.mxu0 0.0
    %860 = vmatprep.subr.mxu0 0.0
    %861 = vmatpush1.msra.mxu0 0.0
    %862 = vmatprep.subr.mxu0 0.0
    %863 = vmatpush1.msra.mxu0 0.0
    %864 = vmatprep.subr.mxu0 0.0
    %865 = vmatpush1.msra.mxu0 0.0
    %866 = vmatprep.mubr.f32.mxu0 0.0
    %867 = vmatmul.mubr.f32.gmra.mrb[0].mxu0 %v800
    %v868 = vpop.f32.mrb[0].mxu0
    %v869 = vadd.f32 0.0, %v868
    %v870 = vpop.f32.mrb[0].mxu0
    %871 = vdwg.mxu0
    %v873 = vsel %vm134, %v644, 0
    %875 = vmatprep.subr.mxu0 0.0
    %876 = vmatpush1.msra.mxu0 %v121
    %877 = vmatprep.subr.mxu0 0.0
    %878 = vmatpush1.msra.mxu0 0.0
    %879 = vmatprep.subr.mxu0 0.0
    %880 = vmatpush1.msra.mxu0 0.0
    %881 = vmatprep.subr.mxu0 0.0
    %882 = vmatpush1.msra.mxu0 0.0
    %883 = vmatprep.subr.mxu0 0.0
    %884 = vmatpush1.msra.mxu0 0.0
    %885 = vmatprep.subr.mxu0 0.0
    %886 = vmatpush1.msra.mxu0 0.0
    %887 = vmatprep.subr.mxu0 0.0
    %888 = vmatpush1.msra.mxu0 0.0
    %889 = vmatprep.subr.mxu0 0.0
    %890 = vmatpush1.msra.mxu0 0.0
    %891 = vmatprep.subr.mxu0 0.0
    %892 = vmatpush1.msra.mxu0 0.0
    %893 = vmatprep.subr.mxu0 0.0
    %894 = vmatpush1.msra.mxu0 0.0
    %895 = vmatprep.subr.mxu0 0.0
    %896 = vmatpush1.msra.mxu0 0.0
    %897 = vmatprep.subr.mxu0 0.0
    %898 = vmatpush1.msra.mxu0 0.0
    %899 = vmatprep.subr.mxu0 0.0
    %900 = vmatpush1.msra.mxu0 0.0
    %901 = vmatprep.subr.mxu0 0.0
    %902 = vmatpush1.msra.mxu0 0.0
    %903 = vmatprep.subr.mxu0 0.0
    %904 = vmatpush1.msra.mxu0 0.0
    %905 = vmatprep.subr.mxu0 0.0
    %906 = vmatpush1.msra.mxu0 0.0
    %907 = vmatprep.subr.mxu0 0.0
    %908 = vmatpush1.msra.mxu0 0.0
    %909 = vmatprep.subr.mxu0 0.0
    %910 = vmatpush1.msra.mxu0 0.0
    %911 = vmatprep.subr.mxu0 0.0
    %912 = vmatpush1.msra.mxu0 0.0
    %913 = vmatprep.subr.mxu0 0.0
    %914 = vmatpush1.msra.mxu0 0.0
    %915 = vmatprep.subr.mxu0 0.0
    %916 = vmatpush1.msra.mxu0 0.0
    %917 = vmatprep.subr.mxu0 0.0
    %918 = vmatpush1.msra.mxu0 0.0
    %919 = vmatprep.subr.mxu0 0.0
    %920 = vmatpush1.msra.mxu0 0.0
    %921 = vmatprep.subr.mxu0 0.0
    %922 = vmatpush1.msra.mxu0 0.0
    %923 = vmatprep.subr.mxu0 0.0
    %924 = vmatpush1.msra.mxu0 0.0
    %925 = vmatprep.subr.mxu0 0.0
    %926 = vmatpush1.msra.mxu0 0.0
    %927 = vmatprep.subr.mxu0 0.0
    %928 = vmatpush1.msra.mxu0 0.0
    %929 = vmatprep.subr.mxu0 0.0
    %930 = vmatpush1.msra.mxu0 0.0
    %931 = vmatprep.subr.mxu0 0.0
    %932 = vmatpush1.msra.mxu0 0.0
    %933 = vmatprep.subr.mxu0 0.0
    %934 = vmatpush1.msra.mxu0 0.0
    %935 = vmatprep.subr.mxu0 0.0
    %936 = vmatpush1.msra.mxu0 0.0
    %937 = vmatprep.subr.mxu0 0.0
    %938 = vmatpush1.msra.mxu0 0.0
    %939 = vmatprep.mubr.f32.mxu0 0.0
    %940 = vmatmul.mubr.f32.gmra.mrb[0].mxu0 %v873
    %v941 = vpop.f32.mrb[0].mxu0
    %v942 = vadd.f32 0.0, %v941
    %v943 = vpop.f32.mrb[0].mxu0
    %944 = vdwg.mxu0
    %v946 = vsel %vm134, %v720, 0
    %948 = vmatprep.subr.mxu0 0.0
    %949 = vmatpush1.msra.mxu0 %v122
    %950 = vmatprep.subr.mxu0 0.0
    %951 = vmatpush1.msra.mxu0 0.0
    %952 = vmatprep.subr.mxu0 0.0
    %953 = vmatpush1.msra.mxu0 0.0
    %954 = vmatprep.subr.mxu0 0.0
    %955 = vmatpush1.msra.mxu0 0.0
    %956 = vmatprep.subr.mxu0 0.0
    %957 = vmatpush1.msra.mxu0 0.0
    %958 = vmatprep.subr.mxu0 0.0
    %959 = vmatpush1.msra.mxu0 0.0
    %960 = vmatprep.subr.mxu0 0.0
    %961 = vmatpush1.msra.mxu0 0.0
    %962 = vmatprep.subr.mxu0 0.0
    %963 = vmatpush1.msra.mxu0 0.0
    %964 = vmatprep.subr.mxu0 0.0
    %965 = vmatpush1.msra.mxu0 0.0
    %966 = vmatprep.subr.mxu0 0.0
    %967 = vmatpush1.msra.mxu0 0.0
    %968 = vmatprep.subr.mxu0 0.0
    %969 = vmatpush1.msra.mxu0 0.0
    %970 = vmatprep.subr.mxu0 0.0
    %971 = vmatpush1.msra.mxu0 0.0
    %972 = vmatprep.subr.mxu0 0.0
    %973 = vmatpush1.msra.mxu0 0.0
    %974 = vmatprep.subr.mxu0 0.0
    %975 = vmatpush1.msra.mxu0 0.0
    %976 = vmatprep.subr.mxu0 0.0
    %977 = vmatpush1.msra.mxu0 0.0
    %978 = vmatprep.subr.mxu0 0.0
    %979 = vmatpush1.msra.mxu0 0.0
    %980 = vmatprep.subr.mxu0 0.0
    %981 = vmatpush1.msra.mxu0 0.0
    %982 = vmatprep.subr.mxu0 0.0
    %983 = vmatpush1.msra.mxu0 0.0
    %984 = vmatprep.subr.mxu0 0.0
    %985 = vmatpush1.msra.mxu0 0.0
    %986 = vmatprep.subr.mxu0 0.0
    %987 = vmatpush1.msra.mxu0 0.0
    %988 = vmatprep.subr.mxu0 0.0
    %989 = vmatpush1.msra.mxu0 0.0
    %990 = vmatprep.subr.mxu0 0.0
    %991 = vmatpush1.msra.mxu0 0.0
    %992 = vmatprep.subr.mxu0 0.0
    %993 = vmatpush1.msra.mxu0 0.0
    %994 = vmatprep.subr.mxu0 0.0
    %995 = vmatpush1.msra.mxu0 0.0
    %996 = vmatprep.subr.mxu0 0.0
    %997 = vmatpush1.msra.mxu0 0.0
    %998 = vmatprep.subr.mxu0 0.0
    %999 = vmatpush1.msra.mxu0 0.0
    %1000 = vmatprep.subr.mxu0 0.0
    %1001 = vmatpush1.msra.mxu0 0.0
    %1002 = vmatprep.subr.mxu0 0.0
    %1003 = vmatpush1.msra.mxu0 0.0
    %1004 = vmatprep.subr.mxu0 0.0
    %1005 = vmatpush1.msra.mxu0 0.0
    %1006 = vmatprep.subr.mxu0 0.0
    %1007 = vmatpush1.msra.mxu0 0.0
    %1008 = vmatprep.subr.mxu0 0.0
    %1009 = vmatpush1.msra.mxu0 0.0
    %1010 = vmatprep.subr.mxu0 0.0
    %1011 = vmatpush1.msra.mxu0 0.0
    %1012 = vmatprep.mubr.f32.mxu0 0.0
    %1013 = vmatmul.mubr.f32.gmra.mrb[0].mxu0 %v946
    %v1014 = vpop.f32.mrb[0].mxu0
    %v1015 = vadd.f32 0.0, %v1014
    %v1016 = vpop.f32.mrb[0].mxu0
    %1017 = vdwg.mxu0
    %v1019 = vsel %vm134, %v796, 0
    %1021 = vmatprep.subr.mxu0 0.0
    %1022 = vmatpush1.msra.mxu0 %v123
    %1023 = vmatprep.subr.mxu0 0.0
    %1024 = vmatpush1.msra.mxu0 0.0
    %1025 = vmatprep.subr.mxu0 0.0
    %1026 = vmatpush1.msra.mxu0 0.0
    %1027 = vmatprep.subr.mxu0 0.0
    %1028 = vmatpush1.msra.mxu0 0.0
    %1029 = vmatprep.subr.mxu0 0.0
    %1030 = vmatpush1.msra.mxu0 0.0
    %1031 = vmatprep.subr.mxu0 0.0
    %1032 = vmatpush1.msra.mxu0 0.0
    %1033 = vmatprep.subr.mxu0 0.0
    %1034 = vmatpush1.msra.mxu0 0.0
    %1035 = vmatprep.subr.mxu0 0.0
    %1036 = vmatpush1.msra.mxu0 0.0
    %1037 = vmatprep.subr.mxu0 0.0
    %1038 = vmatpush1.msra.mxu0 0.0
    %1039 = vmatprep.subr.mxu0 0.0
    %1040 = vmatpush1.msra.mxu0 0.0
    %1041 = vmatprep.subr.mxu0 0.0
    %1042 = vmatpush1.msra.mxu0 0.0
    %1043 = vmatprep.subr.mxu0 0.0
    %1044 = vmatpush1.msra.mxu0 0.0
    %1045 = vmatprep.subr.mxu0 0.0
    %1046 = vmatpush1.msra.mxu0 0.0
    %1047 = vmatprep.subr.mxu0 0.0
    %1048 = vmatpush1.msra.mxu0 0.0
    %1049 = vmatprep.subr.mxu0 0.0
    %1050 = vmatpush1.msra.mxu0 0.0
    %1051 = vmatprep.subr.mxu0 0.0
    %1052 = vmatpush1.msra.mxu0 0.0
    %1053 = vmatprep.subr.mxu0 0.0
    %1054 = vmatpush1.msra.mxu0 0.0
    %1055 = vmatprep.subr.mxu0 0.0
    %1056 = vmatpush1.msra.mxu0 0.0
    %1057 = vmatprep.subr.mxu0 0.0
    %1058 = vmatpush1.msra.mxu0 0.0
    %1059 = vmatprep.subr.mxu0 0.0
    %1060 = vmatpush1.msra.mxu0 0.0
    %1061 = vmatprep.subr.mxu0 0.0
    %1062 = vmatpush1.msra.mxu0 0.0
    %1063 = vmatprep.subr.mxu0 0.0
    %1064 = vmatpush1.msra.mxu0 0.0
    %1065 = vmatprep.subr.mxu0 0.0
    %1066 = vmatpush1.msra.mxu0 0.0
    %1067 = vmatprep.subr.mxu0 0.0
    %1068 = vmatpush1.msra.mxu0 0.0
    %1069 = vmatprep.subr.mxu0 0.0
    %1070 = vmatpush1.msra.mxu0 0.0
    %1071 = vmatprep.subr.mxu0 0.0
    %1072 = vmatpush1.msra.mxu0 0.0
    %1073 = vmatprep.subr.mxu0 0.0
    %1074 = vmatpush1.msra.mxu0 0.0
    %1075 = vmatprep.subr.mxu0 0.0
    %1076 = vmatpush1.msra.mxu0 0.0
    %1077 = vmatprep.subr.mxu0 0.0
    %1078 = vmatpush1.msra.mxu0 0.0
    %1079 = vmatprep.subr.mxu0 0.0
    %1080 = vmatpush1.msra.mxu0 0.0
    %1081 = vmatprep.subr.mxu0 0.0
    %1082 = vmatpush1.msra.mxu0 0.0
    %1083 = vmatprep.subr.mxu0 0.0
    %1084 = vmatpush1.msra.mxu0 0.0
    %1085 = vmatprep.mubr.f32.mxu0 0.0
    %1086 = vmatmul.mubr.f32.gmra.mrb[0].mxu0 %v1019
    %v1087 = vpop.f32.mrb[0].mxu0
    %v1088 = vadd.f32 0.0, %v1087
    %v1089 = vpop.f32.mrb[0].mxu0
    %1090 = vdwg.mxu0
    %v1091 = vsel %vm38, %v869, 0.0
    %v1092 = vsel %vm38, %v942, 0.0
    %v1093 = vadd.f32 %v1091, %v1092
    %v1094 = vsel %vm38, %v1015, 0.0
    %v1095 = vadd.f32 %v1093, %v1094
    %v1096 = vsel %vm38, %v1088, 0.0
    %v1097 = vadd.f32 %v1095, %v1096
    %1099 = vrot.lane.b32.xlu0 %v117, 120
    %v1100 = vpop.permute.xlu0 %1099
    %1101 = vrot.lane.b32.xlu0 %v117, 112
    %v1102 = vpop.permute.xlu0 %1101
    %1103 = vrot.lane.b32.xlu0 %v117, 104
    %v1104 = vpop.permute.xlu0 %1103
    %s1105 = scalar_lea.vmem %s1, 1
    %v1106 = vld [vmem:[%s1105] sm:$0x1]
    %1107 = vrot.lane.b32.xlu0 %v117, 96
    %v1108 = vpop.permute.xlu0 %1107
    %v1109 = vsel %vm134, %v117, 0
    %v1111 = vsel %vm134, %v1108, 0
    %1113 = vmatprep.subr.mxu0 0.0
    %1114 = vmatpush1.xpose.msra.mxu0 %v1111
    %1115 = vmatprep.subr.mxu0 0.0
    %1116 = vmatpush1.xpose.msra.mxu0 0.0
    %1117 = vmatprep.subr.mxu0 0.0
    %1118 = vmatpush1.xpose.msra.mxu0 0.0
    %1119 = vmatprep.subr.mxu0 0.0
    %1120 = vmatpush1.xpose.msra.mxu0 0.0
    %1121 = vmatprep.subr.mxu0 0.0
    %1122 = vmatpush1.xpose.msra.mxu0 0.0
    %1123 = vmatprep.subr.mxu0 0.0
    %1124 = vmatpush1.xpose.msra.mxu0 0.0
    %1125 = vmatprep.subr.mxu0 0.0
    %1126 = vmatpush1.xpose.msra.mxu0 0.0
    %1127 = vmatprep.subr.mxu0 0.0
    %1128 = vmatpush1.xpose.msra.mxu0 0.0
    %1129 = vmatprep.subr.mxu0 0.0
    %1130 = vmatpush1.xpose.msra.mxu0 0.0
    %1131 = vmatprep.subr.mxu0 0.0
    %1132 = vmatpush1.xpose.msra.mxu0 0.0
    %1133 = vmatprep.subr.mxu0 0.0
    %1134 = vmatpush1.xpose.msra.mxu0 0.0
    %1135 = vmatprep.subr.mxu0 0.0
    %1136 = vmatpush1.xpose.msra.mxu0 0.0
    %1137 = vmatprep.subr.mxu0 0.0
    %1138 = vmatpush1.xpose.msra.mxu0 0.0
    %1139 = vmatprep.subr.mxu0 0.0
    %1140 = vmatpush1.xpose.msra.mxu0 0.0
    %1141 = vmatprep.subr.mxu0 0.0
    %1142 = vmatpush1.xpose.msra.mxu0 0.0
    %1143 = vmatprep.subr.mxu0 0.0
    %1144 = vmatpush1.xpose.msra.mxu0 0.0
    %1145 = vmatprep.subr.mxu0 0.0
    %1146 = vmatpush1.xpose.msra.mxu0 0.0
    %1147 = vmatprep.subr.mxu0 0.0
    %1148 = vmatpush1.xpose.msra.mxu0 0.0
    %1149 = vmatprep.subr.mxu0 0.0
    %1150 = vmatpush1.xpose.msra.mxu0 0.0
    %1151 = vmatprep.subr.mxu0 0.0
    %1152 = vmatpush1.xpose.msra.mxu0 0.0
    %1153 = vmatprep.subr.mxu0 0.0
    %1154 = vmatpush1.xpose.msra.mxu0 0.0
    %1155 = vmatprep.subr.mxu0 0.0
    %1156 = vmatpush1.xpose.msra.mxu0 0.0
    %1157 = vmatprep.subr.mxu0 0.0
    %1158 = vmatpush1.xpose.msra.mxu0 0.0
    %1159 = vmatprep.subr.mxu0 0.0
    %1160 = vmatpush1.xpose.msra.mxu0 0.0
    %1161 = vmatprep.subr.mxu0 0.0
    %1162 = vmatpush1.xpose.msra.mxu0 0.0
    %1163 = vmatprep.subr.mxu0 0.0
    %1164 = vmatpush1.xpose.msra.mxu0 0.0
    %1165 = vmatprep.subr.mxu0 0.0
    %1166 = vmatpush1.xpose.msra.mxu0 0.0
    %1167 = vmatprep.subr.mxu0 0.0
    %1168 = vmatpush1.xpose.msra.mxu0 0.0
    %1169 = vmatprep.subr.mxu0 0.0
    %1170 = vmatpush1.xpose.msra.mxu0 0.0
    %1171 = vmatprep.subr.mxu0 0.0
    %1172 = vmatpush1.xpose.msra.mxu0 0.0
    %1173 = vmatprep.subr.mxu0 0.0
    %1174 = vmatpush1.xpose.msra.mxu0 0.0
    %1175 = vmatprep.subr.mxu0 0.0
    %1176 = vmatpush1.xpose.msra.mxu0 0.0
    %1177 = vmatprep.mubr.f32.mxu0 0.0
    %1178 = vmatmul.mubr.f32.gmra.mrb[0].mxu0 %v1109
    %v1179 = vpop.f32.mrb[0].mxu0
    %v1180 = vadd.f32 0.0, %v1179
    %v1181 = vpop.f32.mrb[0].mxu0
    %1182 = vdwg.mxu0
    %1183 = vrot.lane.b32.xlu0 %v1100, 96
    %v1184 = vpop.permute.xlu0 %1183
    %v1185 = vsel %vm134, %v1100, 0
    %v1187 = vsel %vm134, %v1184, 0
    %1189 = vmatprep.subr.mxu0 0.0
    %1190 = vmatpush1.xpose.msra.mxu0 %v1187
    %1191 = vmatprep.subr.mxu0 0.0
    %1192 = vmatpush1.xpose.msra.mxu0 0.0
    %1193 = vmatprep.subr.mxu0 0.0
    %1194 = vmatpush1.xpose.msra.mxu0 0.0
    %1195 = vmatprep.subr.mxu0 0.0
    %1196 = vmatpush1.xpose.msra.mxu0 0.0
    %1197 = vmatprep.subr.mxu0 0.0
    %1198 = vmatpush1.xpose.msra.mxu0 0.0
    %1199 = vmatprep.subr.mxu0 0.0
    %1200 = vmatpush1.xpose.msra.mxu0 0.0
    %1201 = vmatprep.subr.mxu0 0.0
    %1202 = vmatpush1.xpose.msra.mxu0 0.0
    %1203 = vmatprep.subr.mxu0 0.0
    %1204 = vmatpush1.xpose.msra.mxu0 0.0
    %1205 = vmatprep.subr.mxu0 0.0
    %1206 = vmatpush1.xpose.msra.mxu0 0.0
    %1207 = vmatprep.subr.mxu0 0.0
    %1208 = vmatpush1.xpose.msra.mxu0 0.0
    %1209 = vmatprep.subr.mxu0 0.0
    %1210 = vmatpush1.xpose.msra.mxu0 0.0
    %1211 = vmatprep.subr.mxu0 0.0
    %1212 = vmatpush1.xpose.msra.mxu0 0.0
    %1213 = vmatprep.subr.mxu0 0.0
    %1214 = vmatpush1.xpose.msra.mxu0 0.0
    %1215 = vmatprep.subr.mxu0 0.0
    %1216 = vmatpush1.xpose.msra.mxu0 0.0
    %1217 = vmatprep.subr.mxu0 0.0
    %1218 = vmatpush1.xpose.msra.mxu0 0.0
    %1219 = vmatprep.subr.mxu0 0.0
    %1220 = vmatpush1.xpose.msra.mxu0 0.0
    %1221 = vmatprep.subr.mxu0 0.0
    %1222 = vmatpush1.xpose.msra.mxu0 0.0
    %1223 = vmatprep.subr.mxu0 0.0
    %1224 = vmatpush1.xpose.msra.mxu0 0.0
    %1225 = vmatprep.subr.mxu0 0.0
    %1226 = vmatpush1.xpose.msra.mxu0 0.0
    %1227 = vmatprep.subr.mxu0 0.0
    %1228 = vmatpush1.xpose.msra.mxu0 0.0
    %1229 = vmatprep.subr.mxu0 0.0
    %1230 = vmatpush1.xpose.msra.mxu0 0.0
    %1231 = vmatprep.subr.mxu0 0.0
    %1232 = vmatpush1.xpose.msra.mxu0 0.0
    %1233 = vmatprep.subr.mxu0 0.0
    %1234 = vmatpush1.xpose.msra.mxu0 0.0
    %1235 = vmatprep.subr.mxu0 0.0
    %1236 = vmatpush1.xpose.msra.mxu0 0.0
    %1237 = vmatprep.subr.mxu0 0.0
    %1238 = vmatpush1.xpose.msra.mxu0 0.0
    %1239 = vmatprep.subr.mxu0 0.0
    %1240 = vmatpush1.xpose.msra.mxu0 0.0
    %1241 = vmatprep.subr.mxu0 0.0
    %1242 = vmatpush1.xpose.msra.mxu0 0.0
    %1243 = vmatprep.subr.mxu0 0.0
    %1244 = vmatpush1.xpose.msra.mxu0 0.0
    %1245 = vmatprep.subr.mxu0 0.0
    %1246 = vmatpush1.xpose.msra.mxu0 0.0
    %1247 = vmatprep.subr.mxu0 0.0
    %1248 = vmatpush1.xpose.msra.mxu0 0.0
    %1249 = vmatprep.subr.mxu0 0.0
    %1250 = vmatpush1.xpose.msra.mxu0 0.0
    %1251 = vmatprep.subr.mxu0 0.0
    %1252 = vmatpush1.xpose.msra.mxu0 0.0
    %1253 = vmatprep.mubr.f32.mxu0 0.0
    %1254 = vmatmul.mubr.f32.gmra.mrb[0].mxu0 %v1185
    %v1255 = vpop.f32.mrb[0].mxu0
    %v1256 = vadd.f32 0.0, %v1255
    %v1257 = vpop.f32.mrb[0].mxu0
    %1258 = vdwg.mxu0
    %1259 = vrot.lane.b32.xlu0 %v1102, 96
    %v1260 = vpop.permute.xlu0 %1259
    %v1261 = vsel %vm134, %v1102, 0
    %v1263 = vsel %vm134, %v1260, 0
    %1265 = vmatprep.subr.mxu0 0.0
    %1266 = vmatpush1.xpose.msra.mxu0 %v1263
    %1267 = vmatprep.subr.mxu0 0.0
    %1268 = vmatpush1.xpose.msra.mxu0 0.0
    %1269 = vmatprep.subr.mxu0 0.0
    %1270 = vmatpush1.xpose.msra.mxu0 0.0
    %1271 = vmatprep.subr.mxu0 0.0
    %1272 = vmatpush1.xpose.msra.mxu0 0.0
    %1273 = vmatprep.subr.mxu0 0.0
    %1274 = vmatpush1.xpose.msra.mxu0 0.0
    %1275 = vmatprep.subr.mxu0 0.0
    %1276 = vmatpush1.xpose.msra.mxu0 0.0
    %1277 = vmatprep.subr.mxu0 0.0
    %1278 = vmatpush1.xpose.msra.mxu0 0.0
    %1279 = vmatprep.subr.mxu0 0.0
    %1280 = vmatpush1.xpose.msra.mxu0 0.0
    %1281 = vmatprep.subr.mxu0 0.0
    %1282 = vmatpush1.xpose.msra.mxu0 0.0
    %1283 = vmatprep.subr.mxu0 0.0
    %1284 = vmatpush1.xpose.msra.mxu0 0.0
    %1285 = vmatprep.subr.mxu0 0.0
    %1286 = vmatpush1.xpose.msra.mxu0 0.0
    %1287 = vmatprep.subr.mxu0 0.0
    %1288 = vmatpush1.xpose.msra.mxu0 0.0
    %1289 = vmatprep.subr.mxu0 0.0
    %1290 = vmatpush1.xpose.msra.mxu0 0.0
    %1291 = vmatprep.subr.mxu0 0.0
    %1292 = vmatpush1.xpose.msra.mxu0 0.0
    %1293 = vmatprep.subr.mxu0 0.0
    %1294 = vmatpush1.xpose.msra.mxu0 0.0
    %1295 = vmatprep.subr.mxu0 0.0
    %1296 = vmatpush1.xpose.msra.mxu0 0.0
    %1297 = vmatprep.subr.mxu0 0.0
    %1298 = vmatpush1.xpose.msra.mxu0 0.0
    %1299 = vmatprep.subr.mxu0 0.0
    %1300 = vmatpush1.xpose.msra.mxu0 0.0
    %1301 = vmatprep.subr.mxu0 0.0
    %1302 = vmatpush1.xpose.msra.mxu0 0.0
    %1303 = vmatprep.subr.mxu0 0.0
    %1304 = vmatpush1.xpose.msra.mxu0 0.0
    %1305 = vmatprep.subr.mxu0 0.0
    %1306 = vmatpush1.xpose.msra.mxu0 0.0
    %1307 = vmatprep.subr.mxu0 0.0
    %1308 = vmatpush1.xpose.msra.mxu0 0.0
    %1309 = vmatprep.subr.mxu0 0.0
    %1310 = vmatpush1.xpose.msra.mxu0 0.0
    %1311 = vmatprep.subr.mxu0 0.0
    %1312 = vmatpush1.xpose.msra.mxu0 0.0
    %1313 = vmatprep.subr.mxu0 0.0
    %1314 = vmatpush1.xpose.msra.mxu0 0.0
    %1315 = vmatprep.subr.mxu0 0.0
    %1316 = vmatpush1.xpose.msra.mxu0 0.0
    %1317 = vmatprep.subr.mxu0 0.0
    %1318 = vmatpush1.xpose.msra.mxu0 0.0
    %1319 = vmatprep.subr.mxu0 0.0
    %1320 = vmatpush1.xpose.msra.mxu0 0.0
    %1321 = vmatprep.subr.mxu0 0.0
    %1322 = vmatpush1.xpose.msra.mxu0 0.0
    %1323 = vmatprep.subr.mxu0 0.0
    %1324 = vmatpush1.xpose.msra.mxu0 0.0
    %1325 = vmatprep.subr.mxu0 0.0
    %1326 = vmatpush1.xpose.msra.mxu0 0.0
    %1327 = vmatprep.subr.mxu0 0.0
    %1328 = vmatpush1.xpose.msra.mxu0 0.0
    %1329 = vmatprep.mubr.f32.mxu0 0.0
    %1330 = vmatmul.mubr.f32.gmra.mrb[0].mxu0 %v1261
    %v1331 = vpop.f32.mrb[0].mxu0
    %v1332 = vadd.f32 0.0, %v1331
    %v1333 = vpop.f32.mrb[0].mxu0
    %1334 = vdwg.mxu0
    %1335 = vrot.lane.b32.xlu0 %v1104, 96
    %v1336 = vpop.permute.xlu0 %1335
    %v1337 = vsel %vm134, %v1104, 0
    %v1339 = vsel %vm134, %v1336, 0
    %1341 = vmatprep.subr.mxu0 0.0
    %1342 = vmatpush1.xpose.msra.mxu0 %v1339
    %1343 = vmatprep.subr.mxu0 0.0
    %1344 = vmatpush1.xpose.msra.mxu0 0.0
    %1345 = vmatprep.subr.mxu0 0.0
    %1346 = vmatpush1.xpose.msra.mxu0 0.0
    %1347 = vmatprep.subr.mxu0 0.0
    %1348 = vmatpush1.xpose.msra.mxu0 0.0
    %1349 = vmatprep.subr.mxu0 0.0
    %1350 = vmatpush1.xpose.msra.mxu0 0.0
    %1351 = vmatprep.subr.mxu0 0.0
    %1352 = vmatpush1.xpose.msra.mxu0 0.0
    %1353 = vmatprep.subr.mxu0 0.0
    %1354 = vmatpush1.xpose.msra.mxu0 0.0
    %1355 = vmatprep.subr.mxu0 0.0
    %1356 = vmatpush1.xpose.msra.mxu0 0.0
    %1357 = vmatprep.subr.mxu0 0.0
    %1358 = vmatpush1.xpose.msra.mxu0 0.0
    %1359 = vmatprep.subr.mxu0 0.0
    %1360 = vmatpush1.xpose.msra.mxu0 0.0
    %1361 = vmatprep.subr.mxu0 0.0
    %1362 = vmatpush1.xpose.msra.mxu0 0.0
    %1363 = vmatprep.subr.mxu0 0.0
    %1364 = vmatpush1.xpose.msra.mxu0 0.0
    %1365 = vmatprep.subr.mxu0 0.0
    %1366 = vmatpush1.xpose.msra.mxu0 0.0
    %1367 = vmatprep.subr.mxu0 0.0
    %1368 = vmatpush1.xpose.msra.mxu0 0.0
    %1369 = vmatprep.subr.mxu0 0.0
    %1370 = vmatpush1.xpose.msra.mxu0 0.0
    %1371 = vmatprep.subr.mxu0 0.0
    %1372 = vmatpush1.xpose.msra.mxu0 0.0
    %1373 = vmatprep.subr.mxu0 0.0
    %1374 = vmatpush1.xpose.msra.mxu0 0.0
    %1375 = vmatprep.subr.mxu0 0.0
    %1376 = vmatpush1.xpose.msra.mxu0 0.0
    %1377 = vmatprep.subr.mxu0 0.0
    %1378 = vmatpush1.xpose.msra.mxu0 0.0
    %1379 = vmatprep.subr.mxu0 0.0
    %1380 = vmatpush1.xpose.msra.mxu0 0.0
    %1381 = vmatprep.subr.mxu0 0.0
    %1382 = vmatpush1.xpose.msra.mxu0 0.0
    %1383 = vmatprep.subr.mxu0 0.0
    %1384 = vmatpush1.xpose.msra.mxu0 0.0
    %1385 = vmatprep.subr.mxu0 0.0
    %1386 = vmatpush1.xpose.msra.mxu0 0.0
    %1387 = vmatprep.subr.mxu0 0.0
    %1388 = vmatpush1.xpose.msra.mxu0 0.0
    %1389 = vmatprep.subr.mxu0 0.0
    %1390 = vmatpush1.xpose.msra.mxu0 0.0
    %1391 = vmatprep.subr.mxu0 0.0
    %1392 = vmatpush1.xpose.msra.mxu0 0.0
    %1393 = vmatprep.subr.mxu0 0.0
    %1394 = vmatpush1.xpose.msra.mxu0 0.0
    %1395 = vmatprep.subr.mxu0 0.0
    %1396 = vmatpush1.xpose.msra.mxu0 0.0
    %1397 = vmatprep.subr.mxu0 0.0
    %1398 = vmatpush1.xpose.msra.mxu0 0.0
    %1399 = vmatprep.subr.mxu0 0.0
    %1400 = vmatpush1.xpose.msra.mxu0 0.0
    %1401 = vmatprep.subr.mxu0 0.0
    %1402 = vmatpush1.xpose.msra.mxu0 0.0
    %1403 = vmatprep.subr.mxu0 0.0
    %1404 = vmatpush1.xpose.msra.mxu0 0.0
    %1405 = vmatprep.mubr.f32.mxu0 0.0
    %1406 = vmatmul.mubr.f32.gmra.mrb[0].mxu0 %v1337
    %v1407 = vpop.f32.mrb[0].mxu0
    %v1408 = vadd.f32 0.0, %v1407
    %v1409 = vpop.f32.mrb[0].mxu0
    %1410 = vdwg.mxu0
    %v1411 = vmul.f32 %v1180, 0.35355338
    %v1412 = vmul.f32 %v1256, 0.35355338
    %v1413 = vmul.f32 %v1332, 0.35355338
    %v1414 = vmul.f32 %v1408, 0.35355338
    %v1416 = vlaneseq
    %v1417 = vshrl.u32 %v1416, 7
    %v1418 = vsub.s32 0, %v1417
    %v1419 = vrot.slane %v1106, %v1418
    %v1421 = vadd.f32 %v1411, %v1419
    %v1422 = vadd.f32 %v1412, %v1419
    %v1423 = vadd.f32 %v1413, %v1419
    %v1424 = vadd.f32 %v1414, %v1419
    %v1425 = vsel %vm134, %v1421, -inf
    %1426 = vmax.xlane.f32.xlu0 %v1425
    %v1427 = vpop.xlane.xlu0 %1426
    %v1428 = vsel %vm134, %v1422, -inf
    %1429 = vmax.xlane.f32.xlu0 %v1428
    %v1430 = vpop.xlane.xlu0 %1429
    %v1431 = vsel %vm134, %v1423, -inf
    %1432 = vmax.xlane.f32.xlu0 %v1431
    %v1433 = vpop.xlane.xlu0 %1432
    %v1434 = vsel %vm134, %v1424, -inf
    %1435 = vmax.xlane.f32.xlu0 %v1434
    %v1436 = vpop.xlane.xlu0 %1435
    %v1437 = vsub.f32 %v1421, %v1427
    %v1438 = vsub.f32 %v1422, %v1430
    %v1439 = vsub.f32 %v1423, %v1433
    %v1440 = vsub.f32 %v1424, %v1436
    %v1441 = vmul.f32 %v1437, 1.442695
    %v1442 = vpow.pop %v1441
    %v1443 = vmul.f32 %v1438, 1.442695
    %v1444 = vpow.pop %v1443
    %v1445 = vmul.f32 %v1439, 1.442695
    %v1446 = vpow.pop %v1445
    %v1447 = vmul.f32 %v1440, 1.442695
    %v1448 = vpow.pop %v1447
    %v1449 = vsel %vm134, %v1442, 0.0
    %1450 = vadd.xlane.f32.xlu0 %v1449
    %v1451 = vpop.xlane.xlu0 %1450
    %v1452 = vsel %vm134, %v1444, 0.0
    %1453 = vadd.xlane.f32.xlu0 %v1452
    %v1454 = vpop.xlane.xlu0 %1453
    %v1455 = vsel %vm134, %v1446, 0.0
    %1456 = vadd.xlane.f32.xlu0 %v1455
    %v1457 = vpop.xlane.xlu0 %1456
    %v1458 = vsel %vm134, %v1448, 0.0
    %1459 = vadd.xlane.f32.xlu0 %v1458
    %v1460 = vpop.xlane.xlu0 %1459
    %v1461 = vrcp.pop %v1451
    %v1462 = vrcp.pop %v1454
    %v1463 = vrcp.pop %v1457
    %v1464 = vrcp.pop %v1460
    %v1465 = vmul.f32 %v1442, %v1461
    %v1466 = vmul.f32 %v1444, %v1462
    %v1467 = vmul.f32 %v1446, %v1463
    %v1468 = vmul.f32 %v1448, %v1464
    %1469 = vrot.lane.b32.xlu0 %v117, 64
    %v1470 = vpop.permute.xlu0 %1469
    %v1473 = vsel %vm134, %v1465, 0
    %1475 = vmatprep.subr.mxu0 0.0
    %1476 = vmatpush1.msra.mxu0 %v1470
    %1477 = vmatprep.subr.mxu0 0.0
    %1478 = vmatpush1.msra.mxu0 0.0
    %1479 = vmatprep.subr.mxu0 0.0
    %1480 = vmatpush1.msra.mxu0 0.0
    %1481 = vmatprep.subr.mxu0 0.0
    %1482 = vmatpush1.msra.mxu0 0.0
    %1483 = vmatprep.subr.mxu0 0.0
    %1484 = vmatpush1.msra.mxu0 0.0
    %1485 = vmatprep.subr.mxu0 0.0
    %1486 = vmatpush1.msra.mxu0 0.0
    %1487 = vmatprep.subr.mxu0 0.0
    %1488 = vmatpush1.msra.mxu0 0.0
    %1489 = vmatprep.subr.mxu0 0.0
    %1490 = vmatpush1.msra.mxu0 0.0
    %1491 = vmatprep.subr.mxu0 0.0
    %1492 = vmatpush1.msra.mxu0 0.0
    %1493 = vmatprep.subr.mxu0 0.0
    %1494 = vmatpush1.msra.mxu0 0.0
    %1495 = vmatprep.subr.mxu0 0.0
    %1496 = vmatpush1.msra.mxu0 0.0
    %1497 = vmatprep.subr.mxu0 0.0
    %1498 = vmatpush1.msra.mxu0 0.0
    %1499 = vmatprep.subr.mxu0 0.0
    %1500 = vmatpush1.msra.mxu0 0.0
    %1501 = vmatprep.subr.mxu0 0.0
    %1502 = vmatpush1.msra.mxu0 0.0
    %1503 = vmatprep.subr.mxu0 0.0
    %1504 = vmatpush1.msra.mxu0 0.0
    %1505 = vmatprep.subr.mxu0 0.0
    %1506 = vmatpush1.msra.mxu0 0.0
    %1507 = vmatprep.subr.mxu0 0.0
    %1508 = vmatpush1.msra.mxu0 0.0
    %1509 = vmatprep.subr.mxu0 0.0
    %1510 = vmatpush1.msra.mxu0 0.0
    %1511 = vmatprep.subr.mxu0 0.0
    %1512 = vmatpush1.msra.mxu0 0.0
    %1513 = vmatprep.subr.mxu0 0.0
    %1514 = vmatpush1.msra.mxu0 0.0
    %1515 = vmatprep.subr.mxu0 0.0
    %1516 = vmatpush1.msra.mxu0 0.0
    %1517 = vmatprep.subr.mxu0 0.0
    %1518 = vmatpush1.msra.mxu0 0.0
    %1519 = vmatprep.subr.mxu0 0.0
    %1520 = vmatpush1.msra.mxu0 0.0
    %1521 = vmatprep.subr.mxu0 0.0
    %1522 = vmatpush1.msra.mxu0 0.0
    %1523 = vmatprep.subr.mxu0 0.0
    %1524 = vmatpush1.msra.mxu0 0.0
    %1525 = vmatprep.subr.mxu0 0.0
    %1526 = vmatpush1.msra.mxu0 0.0
    %1527 = vmatprep.subr.mxu0 0.0
    %1528 = vmatpush1.msra.mxu0 0.0
    %1529 = vmatprep.subr.mxu0 0.0
    %1530 = vmatpush1.msra.mxu0 0.0
    %1531 = vmatprep.subr.mxu0 0.0
    %1532 = vmatpush1.msra.mxu0 0.0
    %1533 = vmatprep.subr.mxu0 0.0
    %1534 = vmatpush1.msra.mxu0 0.0
    %1535 = vmatprep.subr.mxu0 0.0
    %1536 = vmatpush1.msra.mxu0 0.0
    %1537 = vmatprep.subr.mxu0 0.0
    %1538 = vmatpush1.msra.mxu0 0.0
    %1539 = vmatprep.mubr.f32.mxu0 0.0
    %1540 = vmatmul.mubr.f32.gmra.mrb[0].mxu0 %v1473
    %v1541 = vpop.f32.mrb[0].mxu0
    %v1542 = vadd.f32 0.0, %v1541
    %v1543 = vpop.f32.mrb[0].mxu0
    %1544 = vdwg.mxu0
    %1545 = vrot.lane.b32.xlu0 %v1100, 64
    %v1546 = vpop.permute.xlu0 %1545
    %v1549 = vsel %vm134, %v1466, 0
    %1551 = vmatprep.subr.mxu0 0.0
    %1552 = vmatpush1.msra.mxu0 %v1546
    %1553 = vmatprep.subr.mxu0 0.0
    %1554 = vmatpush1.msra.mxu0 0.0
    %1555 = vmatprep.subr.mxu0 0.0
    %1556 = vmatpush1.msra.mxu0 0.0
    %1557 = vmatprep.subr.mxu0 0.0
    %1558 = vmatpush1.msra.mxu0 0.0
    %1559 = vmatprep.subr.mxu0 0.0
    %1560 = vmatpush1.msra.mxu0 0.0
    %1561 = vmatprep.subr.mxu0 0.0
    %1562 = vmatpush1.msra.mxu0 0.0
    %1563 = vmatprep.subr.mxu0 0.0
    %1564 = vmatpush1.msra.mxu0 0.0
    %1565 = vmatprep.subr.mxu0 0.0
    %1566 = vmatpush1.msra.mxu0 0.0
    %1567 = vmatprep.subr.mxu0 0.0
    %1568 = vmatpush1.msra.mxu0 0.0
    %1569 = vmatprep.subr.mxu0 0.0
    %1570 = vmatpush1.msra.mxu0 0.0
    %1571 = vmatprep.subr.mxu0 0.0
    %1572 = vmatpush1.msra.mxu0 0.0
    %1573 = vmatprep.subr.mxu0 0.0
    %1574 = vmatpush1.msra.mxu0 0.0
    %1575 = vmatprep.subr.mxu0 0.0
    %1576 = vmatpush1.msra.mxu0 0.0
    %1577 = vmatprep.subr.mxu0 0.0
    %1578 = vmatpush1.msra.mxu0 0.0
    %1579 = vmatprep.subr.mxu0 0.0
    %1580 = vmatpush1.msra.mxu0 0.0
    %1581 = vmatprep.subr.mxu0 0.0
    %1582 = vmatpush1.msra.mxu0 0.0
    %1583 = vmatprep.subr.mxu0 0.0
    %1584 = vmatpush1.msra.mxu0 0.0
    %1585 = vmatprep.subr.mxu0 0.0
    %1586 = vmatpush1.msra.mxu0 0.0
    %1587 = vmatprep.subr.mxu0 0.0
    %1588 = vmatpush1.msra.mxu0 0.0
    %1589 = vmatprep.subr.mxu0 0.0
    %1590 = vmatpush1.msra.mxu0 0.0
    %1591 = vmatprep.subr.mxu0 0.0
    %1592 = vmatpush1.msra.mxu0 0.0
    %1593 = vmatprep.subr.mxu0 0.0
    %1594 = vmatpush1.msra.mxu0 0.0
    %1595 = vmatprep.subr.mxu0 0.0
    %1596 = vmatpush1.msra.mxu0 0.0
    %1597 = vmatprep.subr.mxu0 0.0
    %1598 = vmatpush1.msra.mxu0 0.0
    %1599 = vmatprep.subr.mxu0 0.0
    %1600 = vmatpush1.msra.mxu0 0.0
    %1601 = vmatprep.subr.mxu0 0.0
    %1602 = vmatpush1.msra.mxu0 0.0
    %1603 = vmatprep.subr.mxu0 0.0
    %1604 = vmatpush1.msra.mxu0 0.0
    %1605 = vmatprep.subr.mxu0 0.0
    %1606 = vmatpush1.msra.mxu0 0.0
    %1607 = vmatprep.subr.mxu0 0.0
    %1608 = vmatpush1.msra.mxu0 0.0
    %1609 = vmatprep.subr.mxu0 0.0
    %1610 = vmatpush1.msra.mxu0 0.0
    %1611 = vmatprep.subr.mxu0 0.0
    %1612 = vmatpush1.msra.mxu0 0.0
    %1613 = vmatprep.subr.mxu0 0.0
    %1614 = vmatpush1.msra.mxu0 0.0
    %1615 = vmatprep.mubr.f32.mxu0 0.0
    %1616 = vmatmul.mubr.f32.gmra.mrb[0].mxu0 %v1549
    %v1617 = vpop.f32.mrb[0].mxu0
    %v1618 = vadd.f32 0.0, %v1617
    %v1619 = vpop.f32.mrb[0].mxu0
    %1620 = vdwg.mxu0
    %1621 = vrot.lane.b32.xlu0 %v1102, 64
    %v1622 = vpop.permute.xlu0 %1621
    %v1625 = vsel %vm134, %v1467, 0
    %1627 = vmatprep.subr.mxu0 0.0
    %1628 = vmatpush1.msra.mxu0 %v1622
    %1629 = vmatprep.subr.mxu0 0.0
    %1630 = vmatpush1.msra.mxu0 0.0
    %1631 = vmatprep.subr.mxu0 0.0
    %1632 = vmatpush1.msra.mxu0 0.0
    %1633 = vmatprep.subr.mxu0 0.0
    %1634 = vmatpush1.msra.mxu0 0.0
    %1635 = vmatprep.subr.mxu0 0.0
    %1636 = vmatpush1.msra.mxu0 0.0
    %1637 = vmatprep.subr.mxu0 0.0
    %1638 = vmatpush1.msra.mxu0 0.0
    %1639 = vmatprep.subr.mxu0 0.0
    %1640 = vmatpush1.msra.mxu0 0.0
    %1641 = vmatprep.subr.mxu0 0.0
    %1642 = vmatpush1.msra.mxu0 0.0
    %1643 = vmatprep.subr.mxu0 0.0
    %1644 = vmatpush1.msra.mxu0 0.0
    %1645 = vmatprep.subr.mxu0 0.0
    %1646 = vmatpush1.msra.mxu0 0.0
    %1647 = vmatprep.subr.mxu0 0.0
    %1648 = vmatpush1.msra.mxu0 0.0
    %1649 = vmatprep.subr.mxu0 0.0
    %1650 = vmatpush1.msra.mxu0 0.0
    %1651 = vmatprep.subr.mxu0 0.0
    %1652 = vmatpush1.msra.mxu0 0.0
    %1653 = vmatprep.subr.mxu0 0.0
    %1654 = vmatpush1.msra.mxu0 0.0
    %1655 = vmatprep.subr.mxu0 0.0
    %1656 = vmatpush1.msra.mxu0 0.0
    %1657 = vmatprep.subr.mxu0 0.0
    %1658 = vmatpush1.msra.mxu0 0.0
    %1659 = vmatprep.subr.mxu0 0.0
    %1660 = vmatpush1.msra.mxu0 0.0
    %1661 = vmatprep.subr.mxu0 0.0
    %1662 = vmatpush1.msra.mxu0 0.0
    %1663 = vmatprep.subr.mxu0 0.0
    %1664 = vmatpush1.msra.mxu0 0.0
    %1665 = vmatprep.subr.mxu0 0.0
    %1666 = vmatpush1.msra.mxu0 0.0
    %1667 = vmatprep.subr.mxu0 0.0
    %1668 = vmatpush1.msra.mxu0 0.0
    %1669 = vmatprep.subr.mxu0 0.0
    %1670 = vmatpush1.msra.mxu0 0.0
    %1671 = vmatprep.subr.mxu0 0.0
    %1672 = vmatpush1.msra.mxu0 0.0
    %1673 = vmatprep.subr.mxu0 0.0
    %1674 = vmatpush1.msra.mxu0 0.0
    %1675 = vmatprep.subr.mxu0 0.0
    %1676 = vmatpush1.msra.mxu0 0.0
    %1677 = vmatprep.subr.mxu0 0.0
    %1678 = vmatpush1.msra.mxu0 0.0
    %1679 = vmatprep.subr.mxu0 0.0
    %1680 = vmatpush1.msra.mxu0 0.0
    %1681 = vmatprep.subr.mxu0 0.0
    %1682 = vmatpush1.msra.mxu0 0.0
    %1683 = vmatprep.subr.mxu0 0.0
    %1684 = vmatpush1.msra.mxu0 0.0
    %1685 = vmatprep.subr.mxu0 0.0
    %1686 = vmatpush1.msra.mxu0 0.0
    %1687 = vmatprep.subr.mxu0 0.0
    %1688 = vmatpush1.msra.mxu0 0.0
    %1689 = vmatprep.subr.mxu0 0.0
    %1690 = vmatpush1.msra.mxu0 0.0
    %1691 = vmatprep.mubr.f32.mxu0 0.0
    %1692 = vmatmul.mubr.f32.gmra.mrb[0].mxu0 %v1625
    %v1693 = vpop.f32.mrb[0].mxu0
    %v1694 = vadd.f32 0.0, %v1693
    %v1695 = vpop.f32.mrb[0].mxu0
    %1696 = vdwg.mxu0
    %1697 = vrot.lane.b32.xlu0 %v1104, 64
    %v1698 = vpop.permute.xlu0 %1697
    %v1701 = vsel %vm134, %v1468, 0
    %1703 = vmatprep.subr.mxu0 0.0
    %1704 = vmatpush1.msra.mxu0 %v1698
    %1705 = vmatprep.subr.mxu0 0.0
    %1706 = vmatpush1.msra.mxu0 0.0
    %1707 = vmatprep.subr.mxu0 0.0
    %1708 = vmatpush1.msra.mxu0 0.0
    %1709 = vmatprep.subr.mxu0 0.0
    %1710 = vmatpush1.msra.mxu0 0.0
    %1711 = vmatprep.subr.mxu0 0.0
    %1712 = vmatpush1.msra.mxu0 0.0
    %1713 = vmatprep.subr.mxu0 0.0
    %1714 = vmatpush1.msra.mxu0 0.0
    %1715 = vmatprep.subr.mxu0 0.0
    %1716 = vmatpush1.msra.mxu0 0.0
    %1717 = vmatprep.subr.mxu0 0.0
    %1718 = vmatpush1.msra.mxu0 0.0
    %1719 = vmatprep.subr.mxu0 0.0
    %1720 = vmatpush1.msra.mxu0 0.0
    %1721 = vmatprep.subr.mxu0 0.0
    %1722 = vmatpush1.msra.mxu0 0.0
    %1723 = vmatprep.subr.mxu0 0.0
    %1724 = vmatpush1.msra.mxu0 0.0
    %1725 = vmatprep.subr.mxu0 0.0
    %1726 = vmatpush1.msra.mxu0 0.0
    %1727 = vmatprep.subr.mxu0 0.0
    %1728 = vmatpush1.msra.mxu0 0.0
    %1729 = vmatprep.subr.mxu0 0.0
    %1730 = vmatpush1.msra.mxu0 0.0
    %1731 = vmatprep.subr.mxu0 0.0
    %1732 = vmatpush1.msra.mxu0 0.0
    %1733 = vmatprep.subr.mxu0 0.0
    %1734 = vmatpush1.msra.mxu0 0.0
    %1735 = vmatprep.subr.mxu0 0.0
    %1736 = vmatpush1.msra.mxu0 0.0
    %1737 = vmatprep.subr.mxu0 0.0
    %1738 = vmatpush1.msra.mxu0 0.0
    %1739 = vmatprep.subr.mxu0 0.0
    %1740 = vmatpush1.msra.mxu0 0.0
    %1741 = vmatprep.subr.mxu0 0.0
    %1742 = vmatpush1.msra.mxu0 0.0
    %1743 = vmatprep.subr.mxu0 0.0
    %1744 = vmatpush1.msra.mxu0 0.0
    %1745 = vmatprep.subr.mxu0 0.0
    %1746 = vmatpush1.msra.mxu0 0.0
    %1747 = vmatprep.subr.mxu0 0.0
    %1748 = vmatpush1.msra.mxu0 0.0
    %1749 = vmatprep.subr.mxu0 0.0
    %1750 = vmatpush1.msra.mxu0 0.0
    %1751 = vmatprep.subr.mxu0 0.0
    %1752 = vmatpush1.msra.mxu0 0.0
    %1753 = vmatprep.subr.mxu0 0.0
    %1754 = vmatpush1.msra.mxu0 0.0
    %1755 = vmatprep.subr.mxu0 0.0
    %1756 = vmatpush1.msra.mxu0 0.0
    %1757 = vmatprep.subr.mxu0 0.0
    %1758 = vmatpush1.msra.mxu0 0.0
    %1759 = vmatprep.subr.mxu0 0.0
    %1760 = vmatpush1.msra.mxu0 0.0
    %1761 = vmatprep.subr.mxu0 0.0
    %1762 = vmatpush1.msra.mxu0 0.0
    %1763 = vmatprep.subr.mxu0 0.0
    %1764 = vmatpush1.msra.mxu0 0.0
    %1765 = vmatprep.subr.mxu0 0.0
    %1766 = vmatpush1.msra.mxu0 0.0
    %1767 = vmatprep.mubr.f32.mxu0 0.0
    %1768 = vmatmul.mubr.f32.gmra.mrb[0].mxu0 %v1701
    %v1769 = vpop.f32.mrb[0].mxu0
    %v1770 = vadd.f32 0.0, %v1769
    %v1771 = vpop.f32.mrb[0].mxu0
    %1772 = vdwg.mxu0
    %v1774 = vsel %vm134, %v1542, 0
    %1776 = vmatprep.subr.mxu0 0.0
    %1777 = vmatpush1.msra.mxu0 %v120
    %1778 = vmatprep.subr.mxu0 0.0
    %1779 = vmatpush1.msra.mxu0 0.0
    %1780 = vmatprep.subr.mxu0 0.0
    %1781 = vmatpush1.msra.mxu0 0.0
    %1782 = vmatprep.subr.mxu0 0.0
    %1783 = vmatpush1.msra.mxu0 0.0
    %1784 = vmatprep.subr.mxu0 0.0
    %1785 = vmatpush1.msra.mxu0 0.0
    %1786 = vmatprep.subr.mxu0 0.0
    %1787 = vmatpush1.msra.mxu0 0.0
    %1788 = vmatprep.subr.mxu0 0.0
    %1789 = vmatpush1.msra.mxu0 0.0
    %1790 = vmatprep.subr.mxu0 0.0
    %1791 = vmatpush1.msra.mxu0 0.0
    %1792 = vmatprep.subr.mxu0 0.0
    %1793 = vmatpush1.msra.mxu0 0.0
    %1794 = vmatprep.subr.mxu0 0.0
    %1795 = vmatpush1.msra.mxu0 0.0
    %1796 = vmatprep.subr.mxu0 0.0
    %1797 = vmatpush1.msra.mxu0 0.0
    %1798 = vmatprep.subr.mxu0 0.0
    %1799 = vmatpush1.msra.mxu0 0.0
    %1800 = vmatprep.subr.mxu0 0.0
    %1801 = vmatpush1.msra.mxu0 0.0
    %1802 = vmatprep.subr.mxu0 0.0
    %1803 = vmatpush1.msra.mxu0 0.0
    %1804 = vmatprep.subr.mxu0 0.0
    %1805 = vmatpush1.msra.mxu0 0.0
    %1806 = vmatprep.subr.mxu0 0.0
    %1807 = vmatpush1.msra.mxu0 0.0
    %1808 = vmatprep.subr.mxu0 0.0
    %1809 = vmatpush1.msra.mxu0 0.0
    %1810 = vmatprep.subr.mxu0 0.0
    %1811 = vmatpush1.msra.mxu0 0.0
    %1812 = vmatprep.subr.mxu0 0.0
    %1813 = vmatpush1.msra.mxu0 0.0
    %1814 = vmatprep.subr.mxu0 0.0
    %1815 = vmatpush1.msra.mxu0 0.0
    %1816 = vmatprep.subr.mxu0 0.0
    %1817 = vmatpush1.msra.mxu0 0.0
    %1818 = vmatprep.subr.mxu0 0.0
    %1819 = vmatpush1.msra.mxu0 0.0
    %1820 = vmatprep.subr.mxu0 0.0
    %1821 = vmatpush1.msra.mxu0 0.0
    %1822 = vmatprep.subr.mxu0 0.0
    %1823 = vmatpush1.msra.mxu0 0.0
    %1824 = vmatprep.subr.mxu0 0.0
    %1825 = vmatpush1.msra.mxu0 0.0
    %1826 = vmatprep.subr.mxu0 0.0
    %1827 = vmatpush1.msra.mxu0 0.0
    %1828 = vmatprep.subr.mxu0 0.0
    %1829 = vmatpush1.msra.mxu0 0.0
    %1830 = vmatprep.subr.mxu0 0.0
    %1831 = vmatpush1.msra.mxu0 0.0
    %1832 = vmatprep.subr.mxu0 0.0
    %1833 = vmatpush1.msra.mxu0 0.0
    %1834 = vmatprep.subr.mxu0 0.0
    %1835 = vmatpush1.msra.mxu0 0.0
    %1836 = vmatprep.subr.mxu0 0.0
    %1837 = vmatpush1.msra.mxu0 0.0
    %1838 = vmatprep.subr.mxu0 0.0
    %1839 = vmatpush1.msra.mxu0 0.0
    %1840 = vmatprep.mubr.f32.mxu0 0.0
    %1841 = vmatmul.mubr.f32.gmra.mrb[0].mxu0 %v1774
    %v1842 = vpop.f32.mrb[0].mxu0
    %v1843 = vadd.f32 0.0, %v1842
    %v1844 = vpop.f32.mrb[0].mxu0
    %1845 = vdwg.mxu0
    %v1847 = vsel %vm134, %v1618, 0
    %1849 = vmatprep.subr.mxu0 0.0
    %1850 = vmatpush1.msra.mxu0 %v121
    %1851 = vmatprep.subr.mxu0 0.0
    %1852 = vmatpush1.msra.mxu0 0.0
    %1853 = vmatprep.subr.mxu0 0.0
    %1854 = vmatpush1.msra.mxu0 0.0
    %1855 = vmatprep.subr.mxu0 0.0
    %1856 = vmatpush1.msra.mxu0 0.0
    %1857 = vmatprep.subr.mxu0 0.0
    %1858 = vmatpush1.msra.mxu0 0.0
    %1859 = vmatprep.subr.mxu0 0.0
    %1860 = vmatpush1.msra.mxu0 0.0
    %1861 = vmatprep.subr.mxu0 0.0
    %1862 = vmatpush1.msra.mxu0 0.0
    %1863 = vmatprep.subr.mxu0 0.0
    %1864 = vmatpush1.msra.mxu0 0.0
    %1865 = vmatprep.subr.mxu0 0.0
    %1866 = vmatpush1.msra.mxu0 0.0
    %1867 = vmatprep.subr.mxu0 0.0
    %1868 = vmatpush1.msra.mxu0 0.0
    %1869 = vmatprep.subr.mxu0 0.0
    %1870 = vmatpush1.msra.mxu0 0.0
    %1871 = vmatprep.subr.mxu0 0.0
    %1872 = vmatpush1.msra.mxu0 0.0
    %1873 = vmatprep.subr.mxu0 0.0
    %1874 = vmatpush1.msra.mxu0 0.0
    %1875 = vmatprep.subr.mxu0 0.0
    %1876 = vmatpush1.msra.mxu0 0.0
    %1877 = vmatprep.subr.mxu0 0.0
    %1878 = vmatpush1.msra.mxu0 0.0
    %1879 = vmatprep.subr.mxu0 0.0
    %1880 = vmatpush1.msra.mxu0 0.0
    %1881 = vmatprep.subr.mxu0 0.0
    %1882 = vmatpush1.msra.mxu0 0.0
    %1883 = vmatprep.subr.mxu0 0.0
    %1884 = vmatpush1.msra.mxu0 0.0
    %1885 = vmatprep.subr.mxu0 0.0
    %1886 = vmatpush1.msra.mxu0 0.0
    %1887 = vmatprep.subr.mxu0 0.0
    %1888 = vmatpush1.msra.mxu0 0.0
    %1889 = vmatprep.subr.mxu0 0.0
    %1890 = vmatpush1.msra.mxu0 0.0
    %1891 = vmatprep.subr.mxu0 0.0
    %1892 = vmatpush1.msra.mxu0 0.0
    %1893 = vmatprep.subr.mxu0 0.0
    %1894 = vmatpush1.msra.mxu0 0.0
    %1895 = vmatprep.subr.mxu0 0.0
    %1896 = vmatpush1.msra.mxu0 0.0
    %1897 = vmatprep.subr.mxu0 0.0
    %1898 = vmatpush1.msra.mxu0 0.0
    %1899 = vmatprep.subr.mxu0 0.0
    %1900 = vmatpush1.msra.mxu0 0.0
    %1901 = vmatprep.subr.mxu0 0.0
    %1902 = vmatpush1.msra.mxu0 0.0
    %1903 = vmatprep.subr.mxu0 0.0
    %1904 = vmatpush1.msra.mxu0 0.0
    %1905 = vmatprep.subr.mxu0 0.0
    %1906 = vmatpush1.msra.mxu0 0.0
    %1907 = vmatprep.subr.mxu0 0.0
    %1908 = vmatpush1.msra.mxu0 0.0
    %1909 = vmatprep.subr.mxu0 0.0
    %1910 = vmatpush1.msra.mxu0 0.0
    %1911 = vmatprep.subr.mxu0 0.0
    %1912 = vmatpush1.msra.mxu0 0.0
    %1913 = vmatprep.mubr.f32.mxu0 0.0
    %1914 = vmatmul.mubr.f32.gmra.mrb[0].mxu0 %v1847
    %v1915 = vpop.f32.mrb[0].mxu0
    %v1916 = vadd.f32 0.0, %v1915
    %v1917 = vpop.f32.mrb[0].mxu0
    %1918 = vdwg.mxu0
    %v1920 = vsel %vm134, %v1694, 0
    %1922 = vmatprep.subr.mxu0 0.0
    %1923 = vmatpush1.msra.mxu0 %v122
    %1924 = vmatprep.subr.mxu0 0.0
    %1925 = vmatpush1.msra.mxu0 0.0
    %1926 = vmatprep.subr.mxu0 0.0
    %1927 = vmatpush1.msra.mxu0 0.0
    %1928 = vmatprep.subr.mxu0 0.0
    %1929 = vmatpush1.msra.mxu0 0.0
    %1930 = vmatprep.subr.mxu0 0.0
    %1931 = vmatpush1.msra.mxu0 0.0
    %1932 = vmatprep.subr.mxu0 0.0
    %1933 = vmatpush1.msra.mxu0 0.0
    %1934 = vmatprep.subr.mxu0 0.0
    %1935 = vmatpush1.msra.mxu0 0.0
    %1936 = vmatprep.subr.mxu0 0.0
    %1937 = vmatpush1.msra.mxu0 0.0
    %1938 = vmatprep.subr.mxu0 0.0
    %1939 = vmatpush1.msra.mxu0 0.0
    %1940 = vmatprep.subr.mxu0 0.0
    %1941 = vmatpush1.msra.mxu0 0.0
    %1942 = vmatprep.subr.mxu0 0.0
    %1943 = vmatpush1.msra.mxu0 0.0
    %1944 = vmatprep.subr.mxu0 0.0
    %1945 = vmatpush1.msra.mxu0 0.0
    %1946 = vmatprep.subr.mxu0 0.0
    %1947 = vmatpush1.msra.mxu0 0.0
    %1948 = vmatprep.subr.mxu0 0.0
    %1949 = vmatpush1.msra.mxu0 0.0
    %1950 = vmatprep.subr.mxu0 0.0
    %1951 = vmatpush1.msra.mxu0 0.0
    %1952 = vmatprep.subr.mxu0 0.0
    %1953 = vmatpush1.msra.mxu0 0.0
    %1954 = vmatprep.subr.mxu0 0.0
    %1955 = vmatpush1.msra.mxu0 0.0
    %1956 = vmatprep.subr.mxu0 0.0
    %1957 = vmatpush1.msra.mxu0 0.0
    %1958 = vmatprep.subr.mxu0 0.0
    %1959 = vmatpush1.msra.mxu0 0.0
    %1960 = vmatprep.subr.mxu0 0.0
    %1961 = vmatpush1.msra.mxu0 0.0
    %1962 = vmatprep.subr.mxu0 0.0
    %1963 = vmatpush1.msra.mxu0 0.0
    %1964 = vmatprep.subr.mxu0 0.0
    %1965 = vmatpush1.msra.mxu0 0.0
    %1966 = vmatprep.subr.mxu0 0.0
    %1967 = vmatpush1.msra.mxu0 0.0
    %1968 = vmatprep.subr.mxu0 0.0
    %1969 = vmatpush1.msra.mxu0 0.0
    %1970 = vmatprep.subr.mxu0 0.0
    %1971 = vmatpush1.msra.mxu0 0.0
    %1972 = vmatprep.subr.mxu0 0.0
    %1973 = vmatpush1.msra.mxu0 0.0
    %1974 = vmatprep.subr.mxu0 0.0
    %1975 = vmatpush1.msra.mxu0 0.0
    %1976 = vmatprep.subr.mxu0 0.0
    %1977 = vmatpush1.msra.mxu0 0.0
    %1978 = vmatprep.subr.mxu0 0.0
    %1979 = vmatpush1.msra.mxu0 0.0
    %1980 = vmatprep.subr.mxu0 0.0
    %1981 = vmatpush1.msra.mxu0 0.0
    %1982 = vmatprep.subr.mxu0 0.0
    %1983 = vmatpush1.msra.mxu0 0.0
    %1984 = vmatprep.subr.mxu0 0.0
    %1985 = vmatpush1.msra.mxu0 0.0
    %1986 = vmatprep.mubr.f32.mxu0 0.0
    %1987 = vmatmul.mubr.f32.gmra.mrb[0].mxu0 %v1920
    %v1988 = vpop.f32.mrb[0].mxu0
    %v1989 = vadd.f32 0.0, %v1988
    %v1990 = vpop.f32.mrb[0].mxu0
    %1991 = vdwg.mxu0
    %v1993 = vsel %vm134, %v1770, 0
    %1995 = vmatprep.subr.mxu0 0.0
    %1996 = vmatpush1.msra.mxu0 %v123
    %1997 = vmatprep.subr.mxu0 0.0
    %1998 = vmatpush1.msra.mxu0 0.0
    %1999 = vmatprep.subr.mxu0 0.0
    %2000 = vmatpush1.msra.mxu0 0.0
    %2001 = vmatprep.subr.mxu0 0.0
    %2002 = vmatpush1.msra.mxu0 0.0
    %2003 = vmatprep.subr.mxu0 0.0
    %2004 = vmatpush1.msra.mxu0 0.0
    %2005 = vmatprep.subr.mxu0 0.0
    %2006 = vmatpush1.msra.mxu0 0.0
    %2007 = vmatprep.subr.mxu0 0.0
    %2008 = vmatpush1.msra.mxu0 0.0
    %2009 = vmatprep.subr.mxu0 0.0
    %2010 = vmatpush1.msra.mxu0 0.0
    %2011 = vmatprep.subr.mxu0 0.0
    %2012 = vmatpush1.msra.mxu0 0.0
    %2013 = vmatprep.subr.mxu0 0.0
    %2014 = vmatpush1.msra.mxu0 0.0
    %2015 = vmatprep.subr.mxu0 0.0
    %2016 = vmatpush1.msra.mxu0 0.0
    %2017 = vmatprep.subr.mxu0 0.0
    %2018 = vmatpush1.msra.mxu0 0.0
    %2019 = vmatprep.subr.mxu0 0.0
    %2020 = vmatpush1.msra.mxu0 0.0
    %2021 = vmatprep.subr.mxu0 0.0
    %2022 = vmatpush1.msra.mxu0 0.0
    %2023 = vmatprep.subr.mxu0 0.0
    %2024 = vmatpush1.msra.mxu0 0.0
    %2025 = vmatprep.subr.mxu0 0.0
    %2026 = vmatpush1.msra.mxu0 0.0
    %2027 = vmatprep.subr.mxu0 0.0
    %2028 = vmatpush1.msra.mxu0 0.0
    %2029 = vmatprep.subr.mxu0 0.0
    %2030 = vmatpush1.msra.mxu0 0.0
    %2031 = vmatprep.subr.mxu0 0.0
    %2032 = vmatpush1.msra.mxu0 0.0
    %2033 = vmatprep.subr.mxu0 0.0
    %2034 = vmatpush1.msra.mxu0 0.0
    %2035 = vmatprep.subr.mxu0 0.0
    %2036 = vmatpush1.msra.mxu0 0.0
    %2037 = vmatprep.subr.mxu0 0.0
    %2038 = vmatpush1.msra.mxu0 0.0
    %2039 = vmatprep.subr.mxu0 0.0
    %2040 = vmatpush1.msra.mxu0 0.0
    %2041 = vmatprep.subr.mxu0 0.0
    %2042 = vmatpush1.msra.mxu0 0.0
    %2043 = vmatprep.subr.mxu0 0.0
    %2044 = vmatpush1.msra.mxu0 0.0
    %2045 = vmatprep.subr.mxu0 0.0
    %2046 = vmatpush1.msra.mxu0 0.0
    %2047 = vmatprep.subr.mxu0 0.0
    %2048 = vmatpush1.msra.mxu0 0.0
    %2049 = vmatprep.subr.mxu0 0.0
    %2050 = vmatpush1.msra.mxu0 0.0
    %2051 = vmatprep.subr.mxu0 0.0
    %2052 = vmatpush1.msra.mxu0 0.0
    %2053 = vmatprep.subr.mxu0 0.0
    %2054 = vmatpush1.msra.mxu0 0.0
    %2055 = vmatprep.subr.mxu0 0.0
    %2056 = vmatpush1.msra.mxu0 0.0
    %2057 = vmatprep.subr.mxu0 0.0
    %2058 = vmatpush1.msra.mxu0 0.0
    %2059 = vmatprep.mubr.f32.mxu0 0.0
    %2060 = vmatmul.mubr.f32.gmra.mrb[0].mxu0 %v1993
    %v2061 = vpop.f32.mrb[0].mxu0
    %v2062 = vadd.f32 0.0, %v2061
    %v2063 = vpop.f32.mrb[0].mxu0
    %2064 = vdwg.mxu0
    %v2065 = vsel %vm38, %v1843, 0.0
    %v2066 = vsel %vm38, %v1916, 0.0
    %v2067 = vadd.f32 %v2065, %v2066
    %v2068 = vsel %vm38, %v1989, 0.0
    %v2069 = vadd.f32 %v2067, %v2068
    %v2070 = vsel %vm38, %v2062, 0.0
    %v2071 = vadd.f32 %v2069, %v2070
    %v2072 = vlaneseq
    %v2073 = vshrl.u32 %v2072, 7
    %v2074 = vsub.s32 1, %v2073
    %v2075 = vrot.slane %v29, %v2074
    %v2076 = vadd.f32 %v1097, %v2075
    %v2077 = vadd.f32 %v2071, %v2075
    %v2078 = vadd.f32 %v2076, %v27
    %v2079 = vadd.f32 %v2077, %v28
    %v2080 = vsel %vm38, %v2078, 0.0
    %2081 = vadd.xlane.f32.xlu0 %v2080
    %v2082 = vpop.xlane.xlu0 %2081
    %v2083 = vsel %vm38, %v2079, 0.0
    %2084 = vadd.xlane.f32.xlu0 %v2083
    %v2085 = vpop.xlane.xlu0 %2084
    %v2086 = vrcp.pop 32.0
    %v2087 = vmul.f32 %v2082, %v2086
    %v2088 = vmul.f32 %v2085, %v2086
    %v2089 = vsub.f32 %v2078, %v2087
    %v2090 = vsub.f32 %v2079, %v2088
    %v2091 = vmul.f32 %v2089, %v2089
    %v2092 = vmul.f32 %v2090, %v2090
    %v2093 = vsel %vm38, %v2091, 0.0
    %2094 = vadd.xlane.f32.xlu0 %v2093
    %v2095 = vpop.xlane.xlu0 %2094
    %v2096 = vsel %vm38, %v2092, 0.0
    %2097 = vadd.xlane.f32.xlu0 %v2096
    %v2098 = vpop.xlane.xlu0 %2097
    %v2099 = vmul.f32 %v2095, %v2086
    %v2100 = vmul.f32 %v2098, %v2086
    %v2101 = vadd.f32 %v2099, 1e-12
    %v2102 = vadd.f32 %v2100, 1e-12
    %v2103 = vrsqrt.pop %v2101
    %v2104 = vrsqrt.pop %v2102
    %v2105 = vmul.f32 %v2089, %v2103
    %v2106 = vmul.f32 %v2090, %v2104
    %v2107 = vlaneseq
    %v2108 = vshrl.u32 %v2107, 7
    %v2109 = vsub.s32 2, %v2108
    %v2110 = vrot.slane %v29, %v2109
    %v2111 = vmul.f32 %v2105, %v2110
    %v2112 = vmul.f32 %v2106, %v2110
    %v2113 = vlaneseq
    %v2114 = vshrl.u32 %v2113, 7
    %v2115 = vsub.s32 3, %v2114
    %v2116 = vrot.slane %v29, %v2115
    %v2117 = vadd.f32 %v2111, %v2116
    %v2118 = vadd.f32 %v2112, %v2116
    %v2119 = vld [vmem:[%s4] sm:$0xff]
    %v2120 = vld [vmem:[%s4 + $0x8] sm:$0xff]
    %v2121 = vld [vmem:[%s4 + $0x10] sm:$0xff]
    %v2122 = vld [vmem:[%s4 + $0x18] sm:$0xff]
    %v2123 = vlaneseq
    %v2124 = vshrl.u32 %v2123, 7
    %v2125 = vsub.s32 4, %v2124
    %v2126 = vrot.slane %v29, %v2125
    %v2128 = vsel %vm38, %v2117, 0
    %v2131 = vsel %vm38, %v2118, 0
    %2133 = vmatprep.subr.mxu0 0.0
    %2134 = vmatpush1.msra.mxu0 %v2119
    %2135 = vmatprep.subr.mxu0 0.0
    %2136 = vmatpush1.msra.mxu0 %v2120
    %2137 = vmatprep.subr.mxu0 0.0
    %2138 = vmatpush1.msra.mxu0 %v2121
    %2139 = vmatprep.subr.mxu0 0.0
    %2140 = vmatpush1.msra.mxu0 %v2122
    %2141 = vmatprep.subr.mxu0 0.0
    %2142 = vmatpush1.msra.mxu0 0.0
    %2143 = vmatprep.subr.mxu0 0.0
    %2144 = vmatpush1.msra.mxu0 0.0
    %2145 = vmatprep.subr.mxu0 0.0
    %2146 = vmatpush1.msra.mxu0 0.0
    %2147 = vmatprep.subr.mxu0 0.0
    %2148 = vmatpush1.msra.mxu0 0.0
    %2149 = vmatprep.subr.mxu0 0.0
    %2150 = vmatpush1.msra.mxu0 0.0
    %2151 = vmatprep.subr.mxu0 0.0
    %2152 = vmatpush1.msra.mxu0 0.0
    %2153 = vmatprep.subr.mxu0 0.0
    %2154 = vmatpush1.msra.mxu0 0.0
    %2155 = vmatprep.subr.mxu0 0.0
    %2156 = vmatpush1.msra.mxu0 0.0
    %2157 = vmatprep.subr.mxu0 0.0
    %2158 = vmatpush1.msra.mxu0 0.0
    %2159 = vmatprep.subr.mxu0 0.0
    %2160 = vmatpush1.msra.mxu0 0.0
    %2161 = vmatprep.subr.mxu0 0.0
    %2162 = vmatpush1.msra.mxu0 0.0
    %2163 = vmatprep.subr.mxu0 0.0
    %2164 = vmatpush1.msra.mxu0 0.0
    %2165 = vmatprep.subr.mxu0 0.0
    %2166 = vmatpush1.msra.mxu0 0.0
    %2167 = vmatprep.subr.mxu0 0.0
    %2168 = vmatpush1.msra.mxu0 0.0
    %2169 = vmatprep.subr.mxu0 0.0
    %2170 = vmatpush1.msra.mxu0 0.0
    %2171 = vmatprep.subr.mxu0 0.0
    %2172 = vmatpush1.msra.mxu0 0.0
    %2173 = vmatprep.subr.mxu0 0.0
    %2174 = vmatpush1.msra.mxu0 0.0
    %2175 = vmatprep.subr.mxu0 0.0
    %2176 = vmatpush1.msra.mxu0 0.0
    %2177 = vmatprep.subr.mxu0 0.0
    %2178 = vmatpush1.msra.mxu0 0.0
    %2179 = vmatprep.subr.mxu0 0.0
    %2180 = vmatpush1.msra.mxu0 0.0
    %2181 = vmatprep.subr.mxu0 0.0
    %2182 = vmatpush1.msra.mxu0 0.0
    %2183 = vmatprep.subr.mxu0 0.0
    %2184 = vmatpush1.msra.mxu0 0.0
    %2185 = vmatprep.subr.mxu0 0.0
    %2186 = vmatpush1.msra.mxu0 0.0
    %2187 = vmatprep.subr.mxu0 0.0
    %2188 = vmatpush1.msra.mxu0 0.0
    %2189 = vmatprep.subr.mxu0 0.0
    %2190 = vmatpush1.msra.mxu0 0.0
    %2191 = vmatprep.subr.mxu0 0.0
    %2192 = vmatpush1.msra.mxu0 0.0
    %2193 = vmatprep.subr.mxu0 0.0
    %2194 = vmatpush1.msra.mxu0 0.0
    %2195 = vmatprep.subr.mxu0 0.0
    %2196 = vmatpush1.msra.mxu0 0.0
    %2197 = vmatprep.mubr.f32.mxu0 0.0
    %2198 = vmatmul.mubr.f32.gmra.mrb[0].mxu0 %v2128
    %v2199 = vpop.f32.mrb[0].mxu0
    %v2200 = vadd.f32 %v2126, %v2199
    %v2201 = vpop.f32.mrb[0].mxu0
    %2202 = vmatprep.mubr.f32.mxu0 0.0
    %2203 = vmatmul.mubr.f32.gmra.mrb[0].mxu0 %v2131
    %v2204 = vpop.f32.mrb[0].mxu0
    %v2205 = vadd.f32 %v2126, %v2204
    %v2206 = vpop.f32.mrb[0].mxu0
    %2207 = vdwg.mxu0
    %v2208 = vmul.f32 %v2200, 0.5
    %v2209 = vmul.f32 %v2205, 0.5
    %v2210 = vmul.f32 %v2200, 0.044715
    %v2211 = vmul.f32 %v2205, 0.044715
    %v2212 = vmul.f32 %v2210, %v2200
    %v2213 = vmul.f32 %v2211, %v2205
    %v2214 = vmul.f32 %v2212, %v2200
    %v2215 = vmul.f32 %v2213, %v2205
    %v2216 = vadd.f32 %v2200, %v2214
    %v2217 = vadd.f32 %v2205, %v2215
    %v2218 = vmul.f32 %v2216, 0.7978846
    %v2219 = vmul.f32 %v2217, 0.7978846
    %v2220 = vtanh.pop %v2218
    %v2221 = vtanh.pop %v2219
    %v2222 = vadd.f32 %v2220, 1.0
    %v2223 = vadd.f32 %v2221, 1.0
    %v2224 = vmul.f32 %v2208, %v2222
    %v2225 = vmul.f32 %v2209, %v2223
    %v2226 = vld [vmem:[%s5] sm:$0xff]
    %v2227 = vld [vmem:[%s5 + $0x8] sm:$0xff]
    %v2228 = vld [vmem:[%s5 + $0x10] sm:$0xff]
    %v2229 = vld [vmem:[%s5 + $0x18] sm:$0xff]
    %v2230 = vld [vmem:[%s5 + $0x20] sm:$0xff]
    %v2231 = vld [vmem:[%s5 + $0x28] sm:$0xff]
    %v2232 = vld [vmem:[%s5 + $0x30] sm:$0xff]
    %v2233 = vld [vmem:[%s5 + $0x38] sm:$0xff]
    %v2234 = vld [vmem:[%s5 + $0x40] sm:$0xff]
    %v2235 = vld [vmem:[%s5 + $0x48] sm:$0xff]
    %v2236 = vld [vmem:[%s5 + $0x50] sm:$0xff]
    %v2237 = vld [vmem:[%s5 + $0x58] sm:$0xff]
    %v2238 = vld [vmem:[%s5 + $0x60] sm:$0xff]
    %v2239 = vld [vmem:[%s5 + $0x68] sm:$0xff]
    %v2240 = vld [vmem:[%s5 + $0x70] sm:$0xff]
    %v2241 = vld [vmem:[%s5 + $0x78] sm:$0xff]
    %v2242 = vlaneseq
    %v2243 = vshrl.u32 %v2242, 7
    %v2244 = vsub.s32 5, %v2243
    %v2245 = vrot.slane %v29, %v2244
    %2246 = vmatprep.subr.mxu0 0.0
    %2247 = vmatpush1.msra.mxu0 %v2226
    %2248 = vmatprep.subr.mxu0 0.0
    %2249 = vmatpush1.msra.mxu0 %v2227
    %2250 = vmatprep.subr.mxu0 0.0
    %2251 = vmatpush1.msra.mxu0 %v2228
    %2252 = vmatprep.subr.mxu0 0.0
    %2253 = vmatpush1.msra.mxu0 %v2229
    %2254 = vmatprep.subr.mxu0 0.0
    %2255 = vmatpush1.msra.mxu0 %v2230
    %2256 = vmatprep.subr.mxu0 0.0
    %2257 = vmatpush1.msra.mxu0 %v2231
    %2258 = vmatprep.subr.mxu0 0.0
    %2259 = vmatpush1.msra.mxu0 %v2232
    %2260 = vmatprep.subr.mxu0 0.0
    %2261 = vmatpush1.msra.mxu0 %v2233
    %2262 = vmatprep.subr.mxu0 0.0
    %2263 = vmatpush1.msra.mxu0 %v2234
    %2264 = vmatprep.subr.mxu0 0.0
    %2265 = vmatpush1.msra.mxu0 %v2235
    %2266 = vmatprep.subr.mxu0 0.0
    %2267 = vmatpush1.msra.mxu0 %v2236
    %2268 = vmatprep.subr.mxu0 0.0
    %2269 = vmatpush1.msra.mxu0 %v2237
    %2270 = vmatprep.subr.mxu0 0.0
    %2271 = vmatpush1.msra.mxu0 %v2238
    %2272 = vmatprep.subr.mxu0 0.0
    %2273 = vmatpush1.msra.mxu0 %v2239
    %2274 = vmatprep.subr.mxu0 0.0
    %2275 = vmatpush1.msra.mxu0 %v2240
    %2276 = vmatprep.subr.mxu0 0.0
    %2277 = vmatpush1.msra.mxu0 %v2241
    %2278 = vmatprep.subr.mxu0 0.0
    %2279 = vmatpush1.msra.mxu0 0.0
    %2280 = vmatprep.subr.mxu0 0.0
    %2281 = vmatpush1.msra.mxu0 0.0
    %2282 = vmatprep.subr.mxu0 0.0
    %2283 = vmatpush1.msra.mxu0 0.0
    %2284 = vmatprep.subr.mxu0 0.0
    %2285 = vmatpush1.msra.mxu0 0.0
    %2286 = vmatprep.subr.mxu0 0.0
    %2287 = vmatpush1.msra.mxu0 0.0
    %2288 = vmatprep.subr.mxu0 0.0
    %2289 = vmatpush1.msra.mxu0 0.0
    %2290 = vmatprep.subr.mxu0 0.0
    %2291 = vmatpush1.msra.mxu0 0.0
    %2292 = vmatprep.subr.mxu0 0.0
    %2293 = vmatpush1.msra.mxu0 0.0
    %2294 = vmatprep.subr.mxu0 0.0
    %2295 = vmatpush1.msra.mxu0 0.0
    %2296 = vmatprep.subr.mxu0 0.0
    %2297 = vmatpush1.msra.mxu0 0.0
    %2298 = vmatprep.subr.mxu0 0.0
    %2299 = vmatpush1.msra.mxu0 0.0
    %2300 = vmatprep.subr.mxu0 0.0
    %2301 = vmatpush1.msra.mxu0 0.0
    %2302 = vmatprep.subr.mxu0 0.0
    %2303 = vmatpush1.msra.mxu0 0.0
    %2304 = vmatprep.subr.mxu0 0.0
    %2305 = vmatpush1.msra.mxu0 0.0
    %2306 = vmatprep.subr.mxu0 0.0
    %2307 = vmatpush1.msra.mxu0 0.0
    %2308 = vmatprep.subr.mxu0 0.0
    %2309 = vmatpush1.msra.mxu0 0.0
    %2310 = vmatprep.mubr.f32.mxu0 0.0
    %2311 = vmatmul.mubr.f32.gmra.mrb[0].mxu0 %v2224
    %v2312 = vpop.f32.mrb[0].mxu0
    %v2313 = vadd.f32 %v2245, %v2312
    %v2314 = vpop.f32.mrb[0].mxu0
    %2315 = vmatprep.mubr.f32.mxu0 0.0
    %2316 = vmatmul.mubr.f32.gmra.mrb[0].mxu0 %v2225
    %v2317 = vpop.f32.mrb[0].mxu0
    %v2318 = vadd.f32 %v2245, %v2317
    %v2319 = vpop.f32.mrb[0].mxu0
    %2320 = vdwg.mxu0
    %v2321 = vadd.f32 %v2313, %v2117
    %v2322 = vadd.f32 %v2318, %v2118
    %v2323 = vsel %vm38, %v2321, 0.0
    %2324 = vadd.xlane.f32.xlu0 %v2323
    %v2325 = vpop.xlane.xlu0 %2324
    %v2326 = vsel %vm38, %v2322, 0.0
    %2327 = vadd.xlane.f32.xlu0 %v2326
    %v2328 = vpop.xlane.xlu0 %2327
    %v2329 = vmul.f32 %v2325, %v2086
    %v2330 = vmul.f32 %v2328, %v2086
    %v2331 = vsub.f32 %v2321, %v2329
    %v2332 = vsub.f32 %v2322, %v2330
    %v2333 = vmul.f32 %v2331, %v2331
    %v2334 = vmul.f32 %v2332, %v2332
    %v2335 = vsel %vm38, %v2333, 0.0
    %2336 = vadd.xlane.f32.xlu0 %v2335
    %v2337 = vpop.xlane.xlu0 %2336
    %v2338 = vsel %vm38, %v2334, 0.0
    %2339 = vadd.xlane.f32.xlu0 %v2338
    %v2340 = vpop.xlane.xlu0 %2339
    %v2341 = vmul.f32 %v2337, %v2086
    %v2342 = vmul.f32 %v2340, %v2086
    %v2343 = vadd.f32 %v2341, 1e-12
    %v2344 = vadd.f32 %v2342, 1e-12
    %v2345 = vrsqrt.pop %v2343
    %v2346 = vrsqrt.pop %v2344
    %v2347 = vmul.f32 %v2331, %v2345
    %v2348 = vmul.f32 %v2332, %v2346
    %v2349 = vlaneseq
    %v2350 = vshrl.u32 %v2349, 7
    %v2351 = vsub.s32 6, %v2350
    %v2352 = vrot.slane %v29, %v2351
    %v2353 = vmul.f32 %v2347, %v2352
    %v2354 = vmul.f32 %v2348, %v2352
    %v2355 = vlaneseq
    %v2356 = vshrl.u32 %v2355, 7
    %v2357 = vsub.s32 7, %v2356
    %v2358 = vrot.slane %v29, %v2357
    %v2359 = vadd.f32 %v2353, %v2358
    %v2360 = vadd.f32 %v2354, %v2358
    %2361 = vst.msk [vmem:[#allocation2] sm:$0xff] %vm38, %v2359
    %2362 = vst.msk [vmem:[#allocation2 + $0x8] sm:$0xff] %vm38, %v2360
    // Predicated region
    $region30: #{tpu_custom_call.1} parent=1 // pred_check
      _
    $region31: #{tpu_custom_call.1} parent=1 // pred_check_branch
      %2364 = sbr.rel (0) target = $region33
    $region32: #{tpu_custom_call.1} parent=1 // pred_region
      %s2366 = ssub.s32 256, 256
      %2367 = vsyncadd [#allocation3], %s2366
      %s2368 = sshll.u32 [#allocation2], 4
      %s2369 = int_to_ptr.vmem [resolvable:$true] %s2368
      %2374 = dma.vmem_to_hbm [thread:$0]  %s2369, 256, %s7, [#allocation3], 128, 128, 8
    $region33: #{tpu_custom_call.1} parent=1 // pred_fallthru
      _
    // Predicated region
    $region34: #{tpu_custom_call.1} parent=1 // pred_check
      _
    $region35: #{tpu_custom_call.1} parent=1 // pred_check_branch
      %2376 = sbr.rel (0) target = $region37
    $region36: #{tpu_custom_call.1} parent=1 // pred_region
      %2377 = dma.done [#allocation3], 256
    $region37: #{tpu_custom_call.1} parent=1 // pred_fallthru
      _
    %2378 = vsyncpa [#allocation3], 1

</llo_original>
